<compile_context>
chip_gen: v6e
topology: v6e:2x2x1
jax: 0.10.0
libtpu: 0.0.40
codegen_flags: <defaults>
</compile_context>

<pallas_src>
import math
from functools import partial

import jax
import jax.numpy as jnp
from jax import lax
from jax.experimental import pallas as pl
from jax.experimental.pallas import tpu as pltpu


def _sigmoid(v):
    # Manual logistic so the Pallas kernel and the pure-JAX reference use
    # bit-identical math (exp + div lower cleanly on the EUP/VPU).
    return 1.0 / (1.0 + jnp.exp(-v))


def _jetx_kernel(x_ref,
                 wih_ref, bih_ref,          # fused fwd|bwd input-to-hidden weights
                 whhf_ref, bhhf_ref,        # forward hidden-to-hidden
                 whhb_ref, bhhb_ref,        # reverse hidden-to-hidden
                 wvs_ref, bvs_ref,          # variable-selection Linear(2H -> H)
                 wp1_ref, bp1_ref,          # pattern_recognition Linear(2H -> H)
                 wp2_ref, bp2_ref,          # pattern_recognition Linear(H -> 3)
                 wg_ref, bg_ref,            # pattern_gate Linear(3 -> H)
                 out_ref,
                 gin_ref, gruf_ref, grub_ref,
                 *, seq_len: int, batch_tile: int, hidden: int, in_size: int):
    S, bt, H = seq_len, batch_tile, hidden

    # ---- fused input projection for BOTH GRU directions (one MXU matmul) ----
    x = x_ref[...]                                        # (bt, S, I)
    xt = jnp.transpose(x, (1, 0, 2)).reshape(S * bt, in_size)   # time-major rows
    gi_all = jnp.dot(xt, wih_ref[...],
                     preferred_element_type=jnp.float32) + bih_ref[...]   # (S*bt, 6H)
    gin_ref[...] = gi_all.reshape(S, bt, 6 * H)

    # Hoist recurrence weights out of the time loops (read once).
    whh_f = whhf_ref[...]
    bhh_f = bhhf_ref[...]
    whh_b = whhb_ref[...]
    bhh_b = bhhb_ref[...]

    def gru_step(gi, h, whh, bhh):
        # PyTorch GRU cell: gates ordered (r, z, n).
        gh = jnp.dot(h, whh, preferred_element_type=jnp.float32) + bhh    # (bt, 3H)
        r = _sigmoid(gi[:, :H] + gh[:, :H])
        z = _sigmoid(gi[:, H:2 * H] + gh[:, H:2 * H])
        n = jnp.tanh(gi[:, 2 * H:] + r * gh[:, 2 * H:])
        return (1.0 - z) * n + z * h

    h0 = jnp.zeros((bt, H), jnp.float32)

    # ---- forward direction ----
    def fwd_body(t, h):
        gi = gin_ref[t][:, :3 * H]                        # (bt, 3H)
        h_new = gru_step(gi, h, whh_f, bhh_f)
        gruf_ref[t] = h_new
        return h_new

    lax.fori_loop(0, S, fwd_body, h0)

    # ---- reverse direction ----
    def bwd_body(i, h):
        t = S - 1 - i
        gi = gin_ref[t][:, 3 * H:]                        # (bt, 3H)
        h_new = gru_step(gi, h, whh_b, bhh_b)
        grub_ref[t] = h_new
        return h_new

    lax.fori_loop(0, S, bwd_body, h0)

    # ---- fused post-GRU feature path on one (S*bt, 2H) slab ----
    gru_out = jnp.concatenate([gruf_ref[...], grub_ref[...]], axis=-1)    # (S, bt, 2H)
    g2 = gru_out.reshape(S * bt, 2 * H)

    processed = jnp.dot(g2, wvs_ref[...],
                        preferred_element_type=jnp.float32) + bvs_ref[...]        # (S*bt, H)
    p1 = jnp.maximum(jnp.dot(g2, wp1_ref[...],
                             preferred_element_type=jnp.float32) + bp1_ref[...], 0.0)
    logits = jnp.dot(p1, wp2_ref[...],
                     preferred_element_type=jnp.float32) + bp2_ref[...]           # (S*bt, 3)

    m = jnp.max(logits, axis=-1, keepdims=True)
    e = jnp.exp(logits - m)
    probs = e / jnp.sum(e, axis=-1, keepdims=True)                                # softmax over 3

    gate = _sigmoid(jnp.dot(probs, wg_ref[...],
                            preferred_element_type=jnp.float32) + bg_ref[...])    # (S*bt, H)

    y = processed * gate                                                          # (S*bt, H)
    out_ref[...] = jnp.transpose(y.reshape(S, bt, H), (1, 0, 2)).astype(out_ref.dtype)


def _pick_batch_tile(B: int) -> int:
    # Largest divisor of B not exceeding 8 (amortize per-grid-step overhead,
    # fold batch into the matmul M dim). For v7x you may prefer B // 2 so both
    # TensorCores get work when B is small.
    for cand in (8, 4, 2, 1):
        if B % cand == 0:
            return cand
    return 1


def jetx_temporal_variable_selection(x, params, *, hidden_size: int, batch_tile=None):
    """x: [B, S, input_size] float32. `params` holds PyTorch-shaped weights.

    Returns the eval-mode forward output [B, S, hidden_size].
    """
    B, S, I = x.shape
    H = hidden_size
    bt = _pick_batch_tile(B) if batch_tile is None else batch_tile
    assert B % bt == 0

    p = params
    # Pre-pack / pre-transpose weights once in the wrapper (layout plumbing).
    wih_all = jnp.concatenate([p["w_ih_f"].T, p["w_ih_b"].T], axis=1)        # (I, 6H)
    bih_all = jnp.concatenate([p["b_ih_f"], p["b_ih_b"]]).reshape(1, 6 * H)  # (1, 6H)
    whh_f = p["w_hh_f"].T                                                    # (H, 3H)
    whh_b = p["w_hh_b"].T
    bhh_f = p["b_hh_f"].reshape(1, 3 * H)
    bhh_b = p["b_hh_b"].reshape(1, 3 * H)
    w_vs = p["w_vs"].T                                                       # (2H, H)
    b_vs = p["b_vs"].reshape(1, H)
    w_p1 = p["w_p1"].T                                                       # (2H, H)
    b_p1 = p["b_p1"].reshape(1, H)
    w_p2 = p["w_p2"].T                                                       # (H, 3)
    b_p2 = p["b_p2"].reshape(1, 3)
    w_g = p["w_g"].T                                                         # (3, H)
    b_g = p["b_g"].reshape(1, H)

    weights = (wih_all, bih_all, whh_f, bhh_f, whh_b, bhh_b,
               w_vs, b_vs, w_p1, b_p1, w_p2, b_p2, w_g, b_g)

    def full_spec(a):
        nd = a.ndim
        return pl.BlockSpec(a.shape, lambda b, _nd=nd: (0,) * _nd)

    kernel = partial(_jetx_kernel, seq_len=S, batch_tile=bt, hidden=H, in_size=I)

    # Advisory cost estimate so XLA schedules surrounding ops sensibly.
    flops = 2 * B * S * (I * 6 * H          # fused input projections
                         + 2 * H * 3 * H    # two hh matmuls per step
                         + 2 * H * H        # VSN linear
                         + 2 * H * H        # pattern hidden linear
                         + H * 3            # pattern logits
                         + 3 * H)           # gate linear
    transcendentals = B * S * (6 * H + H + 3)
    weight_bytes = sum(int(w.size) * 4 for w in weights)
    bytes_accessed = 4 * (x.size + B * S * H) + weight_bytes * (B // bt)
    cost = pl.CostEstimate(flops=int(flops),
                           transcendentals=int(transcendentals),
                           bytes_accessed=int(bytes_accessed))

    out = pl.pallas_call(
        kernel,
        out_shape=jax.ShapeDtypeStruct((B, S, H), x.dtype),
        grid_spec=pltpu.PrefetchScalarGridSpec(
            num_scalar_prefetch=0,
            grid=(B // bt,),
            in_specs=[pl.BlockSpec((bt, S, I), lambda b: (b, 0, 0))]
                     + [full_spec(w) for w in weights],
            out_specs=pl.BlockSpec((bt, S, H), lambda b: (b, 0, 0)),
            scratch_shapes=[
                pltpu.VMEM((S, bt, 6 * H), jnp.float32),   # fused gate inputs (fwd|bwd)
                pltpu.VMEM((S, bt, H), jnp.float32),       # forward GRU outputs
                pltpu.VMEM((S, bt, H), jnp.float32),       # reverse GRU outputs
            ],
        ),
        compiler_params=pltpu.CompilerParams(dimension_semantics=("parallel",)),
        cost_estimate=cost,
    )(x, *weights)
    return out


def _reference(x, params, *, hidden_size: int):
    """Pure-JAX reference mirroring the PyTorch forward in eval mode."""
    H = hidden_size
    p = params

    def gru_dir(x, w_ih, w_hh, b_ih, b_hh, reverse):
        B, S, _ = x.shape
        xs = jnp.flip(x, axis=1) if reverse else x

        def cell(h, x_t):
            gi = x_t @ w_ih.T + b_ih
            gh = h @ w_hh.T + b_hh
            i_r, i_z, i_n = jnp.split(gi, 3, axis=-1)
            h_r, h_z, h_n = jnp.split(gh, 3, axis=-1)
            r = _sigmoid(i_r + h_r)
            z = _sigmoid(i_z + h_z)
            n = jnp.tanh(i_n + r * h_n)
            h_new = (1.0 - z) * n + z * h
            return h_new, h_new

        h0 = jnp.zeros((B, H), x.dtype)
        _, hs = lax.scan(cell, h0, jnp.swapaxes(xs, 0, 1))
        hs = jnp.swapaxes(hs, 0, 1)
        return jnp.flip(hs, axis=1) if reverse else hs

    fwd = gru_dir(x, p["w_ih_f"], p["w_hh_f"], p["b_ih_f"], p["b_hh_f"], False)
    bwd = gru_dir(x, p["w_ih_b"], p["w_hh_b"], p["b_ih_b"], p["b_hh_b"], True)
    gru_out = jnp.concatenate([fwd, bwd], axis=-1)                      # [B, S, 2H]

    processed = gru_out @ p["w_vs"].T + p["b_vs"]                       # VSN single-input path
    hidden_p = jnp.maximum(gru_out @ p["w_p1"].T + p["b_p1"], 0.0)
    logits = hidden_p @ p["w_p2"].T + p["b_p2"]
    m = jnp.max(logits, axis=-1, keepdims=True)
    e = jnp.exp(logits - m)
    pattern_scores = e / jnp.sum(e, axis=-1, keepdims=True)
    gate = _sigmoid(pattern_scores @ p["w_g"].T + p["b_g"])
    return processed * gate


if __name__ == "__main__":
    B, S, I, H = 2, 8, 16, 32   # batch, seq_len, input_size, hidden_size

    key = jax.random.PRNGKey(0)
    ks = jax.random.split(key, 20)

    x = jax.random.normal(ks[0], (B, S, I), dtype=jnp.float32)

    def uni(k, shape, bound):
        return jax.random.uniform(k, shape, minval=-bound, maxval=bound, dtype=jnp.float32)

    b_gru = 1.0 / math.sqrt(H)
    b_2h = 1.0 / math.sqrt(2 * H)
    b_h = 1.0 / math.sqrt(H)
    b_3 = 1.0 / math.sqrt(3.0)

    params = {
        # nn.GRU(input_size=I, hidden=H, bidirectional=True), gate order (r, z, n)
        "w_ih_f": uni(ks[1], (3 * H, I), b_gru),
        "w_hh_f": uni(ks[2], (3 * H, H), b_gru),
        "b_ih_f": uni(ks[3], (3 * H,), b_gru),
        "b_hh_f": uni(ks[4], (3 * H,), b_gru),
        "w_ih_b": uni(ks[5], (3 * H, I), b_gru),
        "w_hh_b": uni(ks[6], (3 * H, H), b_gru),
        "b_ih_b": uni(ks[7], (3 * H,), b_gru),
        "b_hh_b": uni(ks[8], (3 * H,), b_gru),
        # VariableSelectionNetwork: Linear(2H -> H) (single-input early-return path)
        "w_vs": uni(ks[9], (H, 2 * H), b_2h),
        "b_vs": uni(ks[10], (H,), b_2h),
        # pattern_recognition: Linear(2H -> H), Linear(H -> 3)
        "w_p1": uni(ks[11], (H, 2 * H), b_2h),
        "b_p1": uni(ks[12], (H,), b_2h),
        "w_p2": uni(ks[13], (3, H), b_h),
        "b_p2": uni(ks[14], (3,), b_h),
        # pattern_gate: Linear(3 -> H)
        "w_g": uni(ks[15], (H, 3), b_3),
        "b_g": uni(ks[16], (H,), b_3),
    }

    out = jetx_temporal_variable_selection(x, params, hidden_size=H)
    out = jax.block_until_ready(out)

    ref = _reference(x, params, hidden_size=H)

    assert out.shape == (B, S, H)
    max_err = float(jnp.max(jnp.abs(out - ref)))
    assert max_err < 1e-4, f"max abs error {max_err}"

    print("KERNEL_OK")
</pallas_src>

<mosaic_0001>
module attributes {stable_mosaic.version = 11 : i64} {
  func.func @_jetx_kernel(%arg0: i32, %arg1: memref<2x8x16xf32, #tpu.memory_space<vmem>>, %arg2: memref<16x192xf32, #tpu.memory_space<vmem>>, %arg3: memref<1x192xf32, #tpu.memory_space<vmem>>, %arg4: memref<32x96xf32, #tpu.memory_space<vmem>>, %arg5: memref<1x96xf32, #tpu.memory_space<vmem>>, %arg6: memref<32x96xf32, #tpu.memory_space<vmem>>, %arg7: memref<1x96xf32, #tpu.memory_space<vmem>>, %arg8: memref<64x32xf32, #tpu.memory_space<vmem>>, %arg9: memref<1x32xf32, #tpu.memory_space<vmem>>, %arg10: memref<64x32xf32, #tpu.memory_space<vmem>>, %arg11: memref<1x32xf32, #tpu.memory_space<vmem>>, %arg12: memref<32x3xf32, #tpu.memory_space<vmem>>, %arg13: memref<1x3xf32, #tpu.memory_space<vmem>>, %arg14: memref<3x32xf32, #tpu.memory_space<vmem>>, %arg15: memref<1x32xf32, #tpu.memory_space<vmem>>, %arg16: memref<2x8x32xf32, #tpu.memory_space<vmem>>, %arg17: memref<8x2x192xf32, #tpu.memory_space<vmem>>, %arg18: memref<8x2x32xf32, #tpu.memory_space<vmem>>, %arg19: memref<8x2x32xf32, #tpu.memory_space<vmem>>) attributes {dimension_semantics = [#tpu.dimension_semantics<parallel>], iteration_bounds = array<i64: 1>, scalar_prefetch = 0 : i64, scratch_operands = 3 : i64, tpu.core_type = #tpu.core_type<tc>, window_params = [{transform_indices = @transform_0, window_bounds = array<i64: 2, 8, 16>}, {pipeline_mode = #tpu.pipeline_mode<synchronous>, transform_indices = @transform_1, window_bounds = array<i64: 16, 192>}, {pipeline_mode = #tpu.pipeline_mode<synchronous>, transform_indices = @transform_2, window_bounds = array<i64: 1, 192>}, {pipeline_mode = #tpu.pipeline_mode<synchronous>, transform_indices = @transform_3, window_bounds = array<i64: 32, 96>}, {pipeline_mode = #tpu.pipeline_mode<synchronous>, transform_indices = @transform_4, window_bounds = array<i64: 1, 96>}, {pipeline_mode = #tpu.pipeline_mode<synchronous>, transform_indices = @transform_5, window_bounds = array<i64: 32, 96>}, {pipeline_mode = #tpu.pipeline_mode<synchronous>, transform_indices = @transform_6, window_bounds = array<i64: 1, 96>}, {pipeline_mode = #tpu.pipeline_mode<synchronous>, transform_indices = @transform_7, window_bounds = array<i64: 64, 32>}, {pipeline_mode = #tpu.pipeline_mode<synchronous>, transform_indices = @transform_8, window_bounds = array<i64: 1, 32>}, {pipeline_mode = #tpu.pipeline_mode<synchronous>, transform_indices = @transform_9, window_bounds = array<i64: 64, 32>}, {pipeline_mode = #tpu.pipeline_mode<synchronous>, transform_indices = @transform_10, window_bounds = array<i64: 1, 32>}, {pipeline_mode = #tpu.pipeline_mode<synchronous>, transform_indices = @transform_11, window_bounds = array<i64: 32, 3>}, {pipeline_mode = #tpu.pipeline_mode<synchronous>, transform_indices = @transform_12, window_bounds = array<i64: 1, 3>}, {pipeline_mode = #tpu.pipeline_mode<synchronous>, transform_indices = @transform_13, window_bounds = array<i64: 3, 32>}, {pipeline_mode = #tpu.pipeline_mode<synchronous>, transform_indices = @transform_14, window_bounds = array<i64: 1, 32>}, {transform_indices = @transform_15, window_bounds = array<i64: 2, 8, 32>}]} {
    %c0 = arith.constant 0 : index
    %c0_0 = arith.constant 0 : index
    %c0_1 = arith.constant 0 : index
    %0 = vector.load %arg1[%c0, %c0_0, %c0_1] : memref<2x8x16xf32, #tpu.memory_space<vmem>>, vector<2x8x16xf32>
    %1 = tpu.transpose %0, [1, 0, 2] : vector<2x8x16xf32> -> vector<8x2x16xf32>
    %2 = vector.shape_cast %1 : vector<8x2x16xf32> to vector<16x16xf32>
    %c0_2 = arith.constant 0 : index
    %c0_3 = arith.constant 0 : index
    %3 = vector.load %arg2[%c0_2, %c0_3] : memref<16x192xf32, #tpu.memory_space<vmem>>, vector<16x192xf32>
    %cst = arith.constant dense<0.000000e+00> : vector<16x192xf32>
    %4 = tpu.matmul %2, %3, %cst {dimension_numbers = #tpu.dot_dimension_numbers<[1], [0], [0], [1], [0, 0, 1, 1], [], []>} : vector<16x16xf32>, vector<16x192xf32>, vector<16x192xf32> -> vector<16x192xf32>
    %c0_4 = arith.constant 0 : index
    %c0_5 = arith.constant 0 : index
    %5 = vector.load %arg3[%c0_4, %c0_5] : memref<1x192xf32, #tpu.memory_space<vmem>>, vector<1x192xf32>
    %6 = vector.broadcast %5 : vector<1x192xf32> to vector<16x192xf32>
    %7 = arith.addf %4, %6 : vector<16x192xf32>
    %8 = vector.shape_cast %7 : vector<16x192xf32> to vector<8x2x192xf32>
    %c0_6 = arith.constant 0 : index
    %c0_7 = arith.constant 0 : index
    %c0_8 = arith.constant 0 : index
    %9 = vector.load %arg17[%c0_6, %c0_7, %c0_8] : memref<8x2x192xf32, #tpu.memory_space<vmem>>, vector<8x2x192xf32>
    tpu.vector_store %arg17[%c0_6, %c0_7, %c0_8], %8 {strides = array<i32>} : memref<8x2x192xf32, #tpu.memory_space<vmem>>, vector<8x2x192xf32>,
    %c0_9 = arith.constant 0 : index
    %c0_10 = arith.constant 0 : index
    %10 = vector.load %arg4[%c0_9, %c0_10] : memref<32x96xf32, #tpu.memory_space<vmem>>, vector<32x96xf32>
    %c0_11 = arith.constant 0 : index
    %c0_12 = arith.constant 0 : index
    %11 = vector.load %arg5[%c0_11, %c0_12] : memref<1x96xf32, #tpu.memory_space<vmem>>, vector<1x96xf32>
    %c0_13 = arith.constant 0 : index
    %c0_14 = arith.constant 0 : index
    %12 = vector.load %arg6[%c0_13, %c0_14] : memref<32x96xf32, #tpu.memory_space<vmem>>, vector<32x96xf32>
    %c0_15 = arith.constant 0 : index
    %c0_16 = arith.constant 0 : index
    %13 = vector.load %arg7[%c0_15, %c0_16] : memref<1x96xf32, #tpu.memory_space<vmem>>, vector<1x96xf32>
    %cst_17 = arith.constant 0.000000e+00 : f32
    %14 = vector.broadcast %cst_17 : f32 to vector<2x32xf32>
    %c0_i32 = arith.constant 0 : i32
    %c8_i32 = arith.constant 8 : i32
    %15 = arith.addi %c0_i32, %c8_i32 : i32
    %c1_i32 = arith.constant 1 : i32
    %16 = scf.for %arg20 = %c0_i32 to %15 step %c1_i32 iter_args(%arg21 = %14) -> (vector<2x32xf32>)  : i32 {
      %65 = arith.index_cast %arg20 : i32 to index
      %c0_58 = arith.constant 0 : index
      %c0_59 = arith.constant 0 : index
      %66 = vector.load %arg17[%65, %c0_58, %c0_59] : memref<8x2x192xf32, #tpu.memory_space<vmem>>, vector<1x2x192xf32>
      %67 = vector.shape_cast %66 : vector<1x2x192xf32> to vector<2x192xf32>
      %68 = vector.extract_strided_slice %67 {offsets = [0, 0], sizes = [2, 96], strides = [1, 1]} : vector<2x192xf32> to vector<2x96xf32>
      %cst_60 = arith.constant dense<0.000000e+00> : vector<2x96xf32>
      %69 = tpu.matmul %arg21, %10, %cst_60 {dimension_numbers = #tpu.dot_dimension_numbers<[1], [0], [0], [1], [0, 0, 1, 1], [], []>} : vector<2x32xf32>, vector<32x96xf32>, vector<2x96xf32> -> vector<2x96xf32>
      %70 = vector.broadcast %11 : vector<1x96xf32> to vector<2x96xf32>
      %71 = arith.addf %69, %70 : vector<2x96xf32>
      %72 = vector.extract_strided_slice %68 {offsets = [0, 0], sizes = [2, 32], strides = [1, 1]} : vector<2x96xf32> to vector<2x32xf32>
      %73 = vector.extract_strided_slice %71 {offsets = [0, 0], sizes = [2, 32], strides = [1, 1]} : vector<2x96xf32> to vector<2x32xf32>
      %74 = arith.addf %72, %73 : vector<2x32xf32>
      %cst_61 = arith.constant 0.000000e+00 : f32
      %75 = vector.broadcast %cst_61 : f32 to vector<2x32xf32>
      %76 = arith.subf %75, %74 : vector<2x32xf32>
      %77 = math.exp %76 : vector<2x32xf32>
      %cst_62 = arith.constant 1.000000e+00 : f32
      %78 = vector.broadcast %cst_62 : f32 to vector<2x32xf32>
      %79 = arith.addf %78, %77 : vector<2x32xf32>
      %cst_63 = arith.constant 1.000000e+00 : f32
      %80 = vector.broadcast %cst_63 : f32 to vector<2x32xf32>
      %81 = arith.divf %80, %79 : vector<2x32xf32>
      %82 = vector.extract_strided_slice %68 {offsets = [0, 32], sizes = [2, 32], strides = [1, 1]} : vector<2x96xf32> to vector<2x32xf32>
      %83 = vector.extract_strided_slice %71 {offsets = [0, 32], sizes = [2, 32], strides = [1, 1]} : vector<2x96xf32> to vector<2x32xf32>
      %84 = arith.addf %82, %83 : vector<2x32xf32>
      %cst_64 = arith.constant 0.000000e+00 : f32
      %85 = vector.broadcast %cst_64 : f32 to vector<2x32xf32>
      %86 = arith.subf %85, %84 : vector<2x32xf32>
      %87 = math.exp %86 : vector<2x32xf32>
      %cst_65 = arith.constant 1.000000e+00 : f32
      %88 = vector.broadcast %cst_65 : f32 to vector<2x32xf32>
      %89 = arith.addf %88, %87 : vector<2x32xf32>
      %cst_66 = arith.constant 1.000000e+00 : f32
      %90 = vector.broadcast %cst_66 : f32 to vector<2x32xf32>
      %91 = arith.divf %90, %89 : vector<2x32xf32>
      %92 = vector.extract_strided_slice %68 {offsets = [0, 64], sizes = [2, 32], strides = [1, 1]} : vector<2x96xf32> to vector<2x32xf32>
      %93 = vector.extract_strided_slice %71 {offsets = [0, 64], sizes = [2, 32], strides = [1, 1]} : vector<2x96xf32> to vector<2x32xf32>
      %94 = arith.mulf %81, %93 : vector<2x32xf32>
      %95 = arith.addf %92, %94 : vector<2x32xf32>
      %96 = math.tanh %95 : vector<2x32xf32>
      %cst_67 = arith.constant 1.000000e+00 : f32
      %97 = vector.broadcast %cst_67 : f32 to vector<2x32xf32>
      %98 = arith.subf %97, %91 : vector<2x32xf32>
      %99 = arith.mulf %98, %96 : vector<2x32xf32>
      %100 = arith.mulf %91, %arg21 : vector<2x32xf32>
      %101 = arith.addf %99, %100 : vector<2x32xf32>
      %102 = arith.index_cast %arg20 : i32 to index
      %c0_68 = arith.constant 0 : index
      %c0_69 = arith.constant 0 : index
      %103 = vector.load %arg18[%102, %c0_68, %c0_69] : memref<8x2x32xf32, #tpu.memory_space<vmem>>, vector<1x2x32xf32>
      %104 = vector.shape_cast %103 : vector<1x2x32xf32> to vector<2x32xf32>
      %105 = vector.shape_cast %101 : vector<2x32xf32> to vector<1x2x32xf32>
      tpu.vector_store %arg18[%102, %c0_68, %c0_69], %105 {strides = array<i32>} : memref<8x2x32xf32, #tpu.memory_space<vmem>>, vector<1x2x32xf32>,
      scf.yield %101 : vector<2x32xf32>
    }
    %c8_i32_18 = arith.constant 8 : i32
    %c0_i32_19 = arith.constant 0 : i32
    %c8_i32_20 = arith.constant 8 : i32
    %17 = arith.addi %c0_i32_19, %c8_i32_20 : i32
    %c1_i32_21 = arith.constant 1 : i32
    %18 = scf.for %arg20 = %c0_i32_19 to %17 step %c1_i32_21 iter_args(%arg21 = %14) -> (vector<2x32xf32>)  : i32 {
      %c7_i32 = arith.constant 7 : i32
      %65 = arith.subi %c7_i32, %arg20 : i32
      %66 = arith.index_cast %65 : i32 to index
      %c0_58 = arith.constant 0 : index
      %c0_59 = arith.constant 0 : index
      %67 = vector.load %arg17[%66, %c0_58, %c0_59] : memref<8x2x192xf32, #tpu.memory_space<vmem>>, vector<1x2x192xf32>
      %68 = vector.shape_cast %67 : vector<1x2x192xf32> to vector<2x192xf32>
      %69 = vector.extract_strided_slice %68 {offsets = [0, 96], sizes = [2, 96], strides = [1, 1]} : vector<2x192xf32> to vector<2x96xf32>
      %cst_60 = arith.constant dense<0.000000e+00> : vector<2x96xf32>
      %70 = tpu.matmul %arg21, %12, %cst_60 {dimension_numbers = #tpu.dot_dimension_numbers<[1], [0], [0], [1], [0, 0, 1, 1], [], []>} : vector<2x32xf32>, vector<32x96xf32>, vector<2x96xf32> -> vector<2x96xf32>
      %71 = vector.broadcast %13 : vector<1x96xf32> to vector<2x96xf32>
      %72 = arith.addf %70, %71 : vector<2x96xf32>
      %73 = vector.extract_strided_slice %69 {offsets = [0, 0], sizes = [2, 32], strides = [1, 1]} : vector<2x96xf32> to vector<2x32xf32>
      %74 = vector.extract_strided_slice %72 {offsets = [0, 0], sizes = [2, 32], strides = [1, 1]} : vector<2x96xf32> to vector<2x32xf32>
      %75 = arith.addf %73, %74 : vector<2x32xf32>
      %cst_61 = arith.constant 0.000000e+00 : f32
      %76 = vector.broadcast %cst_61 : f32 to vector<2x32xf32>
      %77 = arith.subf %76, %75 : vector<2x32xf32>
      %78 = math.exp %77 : vector<2x32xf32>
      %cst_62 = arith.constant 1.000000e+00 : f32
      %79 = vector.broadcast %cst_62 : f32 to vector<2x32xf32>
      %80 = arith.addf %79, %78 : vector<2x32xf32>
      %cst_63 = arith.constant 1.000000e+00 : f32
      %81 = vector.broadcast %cst_63 : f32 to vector<2x32xf32>
      %82 = arith.divf %81, %80 : vector<2x32xf32>
      %83 = vector.extract_strided_slice %69 {offsets = [0, 32], sizes = [2, 32], strides = [1, 1]} : vector<2x96xf32> to vector<2x32xf32>
      %84 = vector.extract_strided_slice %72 {offsets = [0, 32], sizes = [2, 32], strides = [1, 1]} : vector<2x96xf32> to vector<2x32xf32>
      %85 = arith.addf %83, %84 : vector<2x32xf32>
      %cst_64 = arith.constant 0.000000e+00 : f32
      %86 = vector.broadcast %cst_64 : f32 to vector<2x32xf32>
      %87 = arith.subf %86, %85 : vector<2x32xf32>
      %88 = math.exp %87 : vector<2x32xf32>
      %cst_65 = arith.constant 1.000000e+00 : f32
      %89 = vector.broadcast %cst_65 : f32 to vector<2x32xf32>
      %90 = arith.addf %89, %88 : vector<2x32xf32>
      %cst_66 = arith.constant 1.000000e+00 : f32
      %91 = vector.broadcast %cst_66 : f32 to vector<2x32xf32>
      %92 = arith.divf %91, %90 : vector<2x32xf32>
      %93 = vector.extract_strided_slice %69 {offsets = [0, 64], sizes = [2, 32], strides = [1, 1]} : vector<2x96xf32> to vector<2x32xf32>
      %94 = vector.extract_strided_slice %72 {offsets = [0, 64], sizes = [2, 32], strides = [1, 1]} : vector<2x96xf32> to vector<2x32xf32>
      %95 = arith.mulf %82, %94 : vector<2x32xf32>
      %96 = arith.addf %93, %95 : vector<2x32xf32>
      %97 = math.tanh %96 : vector<2x32xf32>
      %cst_67 = arith.constant 1.000000e+00 : f32
      %98 = vector.broadcast %cst_67 : f32 to vector<2x32xf32>
      %99 = arith.subf %98, %92 : vector<2x32xf32>
      %100 = arith.mulf %99, %97 : vector<2x32xf32>
      %101 = arith.mulf %92, %arg21 : vector<2x32xf32>
      %102 = arith.addf %100, %101 : vector<2x32xf32>
      %103 = arith.index_cast %65 : i32 to index
      %c0_68 = arith.constant 0 : index
      %c0_69 = arith.constant 0 : index
      %104 = vector.load %arg19[%103, %c0_68, %c0_69] : memref<8x2x32xf32, #tpu.memory_space<vmem>>, vector<1x2x32xf32>
      %105 = vector.shape_cast %104 : vector<1x2x32xf32> to vector<2x32xf32>
      %106 = vector.shape_cast %102 : vector<2x32xf32> to vector<1x2x32xf32>
      tpu.vector_store %arg19[%103, %c0_68, %c0_69], %106 {strides = array<i32>} : memref<8x2x32xf32, #tpu.memory_space<vmem>>, vector<1x2x32xf32>,
      scf.yield %102 : vector<2x32xf32>
    }
    %c8_i32_22 = arith.constant 8 : i32
    %c0_23 = arith.constant 0 : index
    %c0_24 = arith.constant 0 : index
    %c0_25 = arith.constant 0 : index
    %19 = vector.load %arg18[%c0_23, %c0_24, %c0_25] : memref<8x2x32xf32, #tpu.memory_space<vmem>>, vector<8x2x32xf32>
    %c0_26 = arith.constant 0 : index
    %c0_27 = arith.constant 0 : index
    %c0_28 = arith.constant 0 : index
    %20 = vector.load %arg19[%c0_26, %c0_27, %c0_28] : memref<8x2x32xf32, #tpu.memory_space<vmem>>, vector<8x2x32xf32>
    %21 = tpu.concatenate %19, %20 in 2 : vector<8x2x32xf32>, vector<8x2x32xf32> -> vector<8x2x64xf32>
    %22 = vector.shape_cast %21 : vector<8x2x64xf32> to vector<16x64xf32>
    %c0_29 = arith.constant 0 : index
    %c0_30 = arith.constant 0 : index
    %23 = vector.load %arg8[%c0_29, %c0_30] : memref<64x32xf32, #tpu.memory_space<vmem>>, vector<64x32xf32>
    %cst_31 = arith.constant dense<0.000000e+00> : vector<16x32xf32>
    %24 = tpu.matmul %22, %23, %cst_31 {dimension_numbers = #tpu.dot_dimension_numbers<[1], [0], [0], [1], [0, 0, 1, 1], [], []>} : vector<16x64xf32>, vector<64x32xf32>, vector<16x32xf32> -> vector<16x32xf32>
    %c0_32 = arith.constant 0 : index
    %c0_33 = arith.constant 0 : index
    %25 = vector.load %arg9[%c0_32, %c0_33] : memref<1x32xf32, #tpu.memory_space<vmem>>, vector<1x32xf32>
    %26 = vector.broadcast %25 : vector<1x32xf32> to vector<16x32xf32>
    %27 = arith.addf %24, %26 : vector<16x32xf32>
    %c0_34 = arith.constant 0 : index
    %c0_35 = arith.constant 0 : index
    %28 = vector.load %arg10[%c0_34, %c0_35] : memref<64x32xf32, #tpu.memory_space<vmem>>, vector<64x32xf32>
    %cst_36 = arith.constant dense<0.000000e+00> : vector<16x32xf32>
    %29 = tpu.matmul %22, %28, %cst_36 {dimension_numbers = #tpu.dot_dimension_numbers<[1], [0], [0], [1], [0, 0, 1, 1], [], []>} : vector<16x64xf32>, vector<64x32xf32>, vector<16x32xf32> -> vector<16x32xf32>
    %c0_37 = arith.constant 0 : index
    %c0_38 = arith.constant 0 : index
    %30 = vector.load %arg11[%c0_37, %c0_38] : memref<1x32xf32, #tpu.memory_space<vmem>>, vector<1x32xf32>
    %31 = vector.broadcast %30 : vector<1x32xf32> to vector<16x32xf32>
    %32 = arith.addf %29, %31 : vector<16x32xf32>
    %cst_39 = arith.constant 0.000000e+00 : f32
    %33 = vector.broadcast %cst_39 : f32 to vector<16x32xf32>
    %34 = arith.maximumf %32, %33 : vector<16x32xf32>
    %c0_40 = arith.constant 0 : index
    %c0_41 = arith.constant 0 : index
    %35 = vector.load %arg12[%c0_40, %c0_41] : memref<32x3xf32, #tpu.memory_space<vmem>>, vector<32x3xf32>
    %cst_42 = arith.constant dense<0.000000e+00> : vector<16x3xf32>
    %36 = tpu.matmul %34, %35, %cst_42 {dimension_numbers = #tpu.dot_dimension_numbers<[1], [0], [0], [1], [0, 0, 1, 1], [], []>} : vector<16x32xf32>, vector<32x3xf32>, vector<16x3xf32> -> vector<16x3xf32>
    %c0_43 = arith.constant 0 : index
    %c0_44 = arith.constant 0 : index
    %37 = vector.load %arg13[%c0_43, %c0_44] : memref<1x3xf32, #tpu.memory_space<vmem>>, vector<1x3xf32>
    %38 = vector.broadcast %37 : vector<1x3xf32> to vector<16x3xf32>
    %39 = arith.addf %36, %38 : vector<16x3xf32>
    %cst_45 = arith.constant dense<0xFF800000> : vector<16xf32>
    %40 = vector.multi_reduction <maximumf>, %39, %cst_45 [1] : vector<16x3xf32> to vector<16xf32>
    %41 = vector.shape_cast %40 : vector<16xf32> to vector<16x1xf32>
    %42 = vector.broadcast %41 : vector<16x1xf32> to vector<16x3xf32>
    %43 = arith.subf %39, %42 : vector<16x3xf32>
    %44 = math.exp %43 : vector<16x3xf32>
    %cst_46 = arith.constant dense<0.000000e+00> : vector<16xf32>
    %45 = vector.multi_reduction <add>, %44, %cst_46 [1] : vector<16x3xf32> to vector<16xf32>
    %46 = vector.shape_cast %45 : vector<16xf32> to vector<16x1xf32>
    %47 = vector.broadcast %46 : vector<16x1xf32> to vector<16x3xf32>
    %48 = arith.divf %44, %47 : vector<16x3xf32>
    %c0_47 = arith.constant 0 : index
    %c0_48 = arith.constant 0 : index
    %49 = vector.load %arg14[%c0_47, %c0_48] : memref<3x32xf32, #tpu.memory_space<vmem>>, vector<3x32xf32>
    %cst_49 = arith.constant dense<0.000000e+00> : vector<16x32xf32>
    %50 = tpu.matmul %48, %49, %cst_49 {dimension_numbers = #tpu.dot_dimension_numbers<[1], [0], [0], [1], [0, 0, 1, 1], [], []>} : vector<16x3xf32>, vector<3x32xf32>, vector<16x32xf32> -> vector<16x32xf32>
    %c0_50 = arith.constant 0 : index
    %c0_51 = arith.constant 0 : index
    %51 = vector.load %arg15[%c0_50, %c0_51] : memref<1x32xf32, #tpu.memory_space<vmem>>, vector<1x32xf32>
    %52 = vector.broadcast %51 : vector<1x32xf32> to vector<16x32xf32>
    %53 = arith.addf %50, %52 : vector<16x32xf32>
    %cst_52 = arith.constant 0.000000e+00 : f32
    %54 = vector.broadcast %cst_52 : f32 to vector<16x32xf32>
    %55 = arith.subf %54, %53 : vector<16x32xf32>
    %56 = math.exp %55 : vector<16x32xf32>
    %cst_53 = arith.constant 1.000000e+00 : f32
    %57 = vector.broadcast %cst_53 : f32 to vector<16x32xf32>
    %58 = arith.addf %57, %56 : vector<16x32xf32>
    %cst_54 = arith.constant 1.000000e+00 : f32
    %59 = vector.broadcast %cst_54 : f32 to vector<16x32xf32>
    %60 = arith.divf %59, %58 : vector<16x32xf32>
    %61 = arith.mulf %27, %60 : vector<16x32xf32>
    %62 = vector.shape_cast %61 : vector<16x32xf32> to vector<8x2x32xf32>
    %63 = tpu.transpose %62, [1, 0, 2] : vector<8x2x32xf32> -> vector<2x8x32xf32>
    %c0_55 = arith.constant 0 : index
    %c0_56 = arith.constant 0 : index
    %c0_57 = arith.constant 0 : index
    %64 = vector.load %arg16[%c0_55, %c0_56, %c0_57] : memref<2x8x32xf32, #tpu.memory_space<vmem>>, vector<2x8x32xf32>
    tpu.vector_store %arg16[%c0_55, %c0_56, %c0_57], %63 {strides = array<i32>} : memref<2x8x32xf32, #tpu.memory_space<vmem>>, vector<2x8x32xf32>,
    return
  }
  func.func @transform_0(%arg0: i32) -> (i32, i32, i32) {
    %c0_i32 = arith.constant 0 : i32
    %c0_i32_0 = arith.constant 0 : i32
    %c0_i32_1 = arith.constant 0 : i32
    return %arg0, %c0_i32, %c0_i32_0 : i32, i32, i32
  }
  func.func @transform_1(%arg0: i32) -> (i32, i32) {
    %c0_i32 = arith.constant 0 : i32
    %c0_i32_0 = arith.constant 0 : i32
    %c0_i32_1 = arith.constant 0 : i32
    return %c0_i32, %c0_i32_0 : i32, i32
  }
  func.func @transform_2(%arg0: i32) -> (i32, i32) {
    %c0_i32 = arith.constant 0 : i32
    %c0_i32_0 = arith.constant 0 : i32
    %c0_i32_1 = arith.constant 0 : i32
    return %c0_i32, %c0_i32_0 : i32, i32
  }
  func.func @transform_3(%arg0: i32) -> (i32, i32) {
    %c0_i32 = arith.constant 0 : i32
    %c0_i32_0 = arith.constant 0 : i32
    %c0_i32_1 = arith.constant 0 : i32
    return %c0_i32, %c0_i32_0 : i32, i32
  }
  func.func @transform_4(%arg0: i32) -> (i32, i32) {
    %c0_i32 = arith.constant 0 : i32
    %c0_i32_0 = arith.constant 0 : i32
    %c0_i32_1 = arith.constant 0 : i32
    return %c0_i32, %c0_i32_0 : i32, i32
  }
  func.func @transform_5(%arg0: i32) -> (i32, i32) {
    %c0_i32 = arith.constant 0 : i32
    %c0_i32_0 = arith.constant 0 : i32
    %c0_i32_1 = arith.constant 0 : i32
    return %c0_i32, %c0_i32_0 : i32, i32
  }
  func.func @transform_6(%arg0: i32) -> (i32, i32) {
    %c0_i32 = arith.constant 0 : i32
    %c0_i32_0 = arith.constant 0 : i32
    %c0_i32_1 = arith.constant 0 : i32
    return %c0_i32, %c0_i32_0 : i32, i32
  }
  func.func @transform_7(%arg0: i32) -> (i32, i32) {
    %c0_i32 = arith.constant 0 : i32
    %c0_i32_0 = arith.constant 0 : i32
    %c0_i32_1 = arith.constant 0 : i32
    return %c0_i32, %c0_i32_0 : i32, i32
  }
  func.func @transform_8(%arg0: i32) -> (i32, i32) {
    %c0_i32 = arith.constant 0 : i32
    %c0_i32_0 = arith.constant 0 : i32
    %c0_i32_1 = arith.constant 0 : i32
    return %c0_i32, %c0_i32_0 : i32, i32
  }
  func.func @transform_9(%arg0: i32) -> (i32, i32) {
    %c0_i32 = arith.constant 0 : i32
    %c0_i32_0 = arith.constant 0 : i32
    %c0_i32_1 = arith.constant 0 : i32
    return %c0_i32, %c0_i32_0 : i32, i32
  }
  func.func @transform_10(%arg0: i32) -> (i32, i32) {
    %c0_i32 = arith.constant 0 : i32
    %c0_i32_0 = arith.constant 0 : i32
    %c0_i32_1 = arith.constant 0 : i32
    return %c0_i32, %c0_i32_0 : i32, i32
  }
  func.func @transform_11(%arg0: i32) -> (i32, i32) {
    %c0_i32 = arith.constant 0 : i32
    %c0_i32_0 = arith.constant 0 : i32
    %c0_i32_1 = arith.constant 0 : i32
    return %c0_i32, %c0_i32_0 : i32, i32
  }
  func.func @transform_12(%arg0: i32) -> (i32, i32) {
    %c0_i32 = arith.constant 0 : i32
    %c0_i32_0 = arith.constant 0 : i32
    %c0_i32_1 = arith.constant 0 : i32
    return %c0_i32, %c0_i32_0 : i32, i32
  }
  func.func @transform_13(%arg0: i32) -> (i32, i32) {
    %c0_i32 = arith.constant 0 : i32
    %c0_i32_0 = arith.constant 0 : i32
    %c0_i32_1 = arith.constant 0 : i32
    return %c0_i32, %c0_i32_0 : i32, i32
  }
  func.func @transform_14(%arg0: i32) -> (i32, i32) {
    %c0_i32 = arith.constant 0 : i32
    %c0_i32_0 = arith.constant 0 : i32
    %c0_i32_1 = arith.constant 0 : i32
    return %c0_i32, %c0_i32_0 : i32, i32
  }
  func.func @transform_15(%arg0: i32) -> (i32, i32, i32) {
    %c0_i32 = arith.constant 0 : i32
    %c0_i32_0 = arith.constant 0 : i32
    %c0_i32_1 = arith.constant 0 : i32
    return %arg0, %c0_i32, %c0_i32_0 : i32, i32, i32
  }
}

</mosaic_0001>

<llo_original>
// kernel: tpu_custom_call.1
$region0: #{tpu_custom_call.1}
  #allocation0 [shape = 'u32[]', space=smem, size = 0x4, offset = 0x4, fixed_abs, tag = 'smem constant byte address 0x4 - core index']
  #allocation1 [shape = 'u32[144,128]{1,0:T(1,128)}', space=vmem, size = 0x12000, scoped, tag = 'internal scratch']
  #allocation2 [shape = 'f32[8,2,192]{2,1,0:T(2,128)}', space=vmem, size = 0x4000, scoped, tag = 'scratch operand']
  #allocation3 [shape = 'f32[8,2,32]{2,1,0:T(2,128)}', space=vmem, size = 0x2000, scoped, tag = 'scratch operand']
  #allocation4 [shape = 'f32[8,2,32]{2,1,0:T(2,128)}', space=vmem, size = 0x2000, scoped, tag = 'scratch operand']
  %s0 = inlined_call_operand.vmem [shape: f32[2,8,16], index: 0, kind: input, shape index: {}]
  %s1 = inlined_call_operand.vmem [shape: f32[16,192], index: 1, kind: input, shape index: {}]
  %s2 = inlined_call_operand.vmem [shape: f32[1,192], index: 2, kind: input, shape index: {}]
  %s3 = inlined_call_operand.vmem [shape: f32[32,96], index: 3, kind: input, shape index: {}]
  %s4 = inlined_call_operand.vmem [shape: f32[1,96], index: 4, kind: input, shape index: {}]
  %s5 = inlined_call_operand.vmem [shape: f32[32,96], index: 5, kind: input, shape index: {}]
  %s6 = inlined_call_operand.vmem [shape: f32[1,96], index: 6, kind: input, shape index: {}]
  %s7 = inlined_call_operand.vmem [shape: f32[64,32], index: 7, kind: input, shape index: {}]
  %s8 = inlined_call_operand.vmem [shape: f32[1,32], index: 8, kind: input, shape index: {}]
  %s9 = inlined_call_operand.vmem [shape: f32[64,32], index: 9, kind: input, shape index: {}]
  %s10 = inlined_call_operand.vmem [shape: f32[1,32], index: 10, kind: input, shape index: {}]
  %s11 = inlined_call_operand.vmem [shape: f32[32,3], index: 11, kind: input, shape index: {}]
  %s12 = inlined_call_operand.vmem [shape: f32[1,3], index: 12, kind: input, shape index: {}]
  %s13 = inlined_call_operand.vmem [shape: f32[3,32], index: 13, kind: input, shape index: {}]
  %s14 = inlined_call_operand.vmem [shape: f32[1,32], index: 14, kind: input, shape index: {}]
  %s15 = inlined_call_operand.hbm [shape: f32[2,8,32], index: 15, kind: output, shape index: {}]
  %s16 = sld [smem:[#allocation0]]
  $region84: #{tpu_custom_call.1} parent=0
    _
  %s18 = ssub.s32 1, %s16
  %s19 = scalar_select 0, %s18, %s16
  $region1: #{tpu_custom_call.1} parent=0
    #allocation5 [shape = 'u8[8192]{0}', space=vmem, size = 0x2000, scoped, tag = 'output window, operand 0, single buffered']
    #allocation6 [shape = 's32[1]{0}', space=sflag, size = 0x4, scoped, tag = 'scoped memory for tpu_custom_call.1']
    %20 = vsyncpa [#allocation6], 0
    // Predicated region
    $region2: #{tpu_custom_call.1} parent=1 // pred_check
      _
    $region3: #{tpu_custom_call.1} parent=1 // pred_check_branch
      %22 = sbr.rel (0) target = $region5
    $region4: #{tpu_custom_call.1} parent=1 // pred_region
      _
    $region5: #{tpu_custom_call.1} parent=1 // pred_fallthru
      _
    // Predicated region
    $region6: #{tpu_custom_call.1} parent=1 // pred_check
      _
    $region7: #{tpu_custom_call.1} parent=1 // pred_check_branch
      %24 = sbr.rel (0) target = $region9
    $region8: #{tpu_custom_call.1} parent=1 // pred_region
      _
    $region9: #{tpu_custom_call.1} parent=1 // pred_fallthru
      _
    // Predicated region
    $region10: #{tpu_custom_call.1} parent=1 // pred_check
      _
    $region11: #{tpu_custom_call.1} parent=1 // pred_check_branch
      %26 = sbr.rel (0) target = $region13
    $region12: #{tpu_custom_call.1} parent=1 // pred_region
      _
    $region13: #{tpu_custom_call.1} parent=1 // pred_fallthru
      _
    // Predicated region
    $region14: #{tpu_custom_call.1} parent=1 // pred_check
      _
    $region15: #{tpu_custom_call.1} parent=1 // pred_check_branch
      %28 = sbr.rel (0) target = $region17
    $region16: #{tpu_custom_call.1} parent=1 // pred_region
      _
    $region17: #{tpu_custom_call.1} parent=1 // pred_fallthru
      _
    // Predicated region
    $region18: #{tpu_custom_call.1} parent=1 // pred_check
      _
    $region19: #{tpu_custom_call.1} parent=1 // pred_check_branch
      %30 = sbr.rel (0) target = $region21
    $region20: #{tpu_custom_call.1} parent=1 // pred_region
      _
    $region21: #{tpu_custom_call.1} parent=1 // pred_fallthru
      _
    // Predicated region
    $region22: #{tpu_custom_call.1} parent=1 // pred_check
      _
    $region23: #{tpu_custom_call.1} parent=1 // pred_check_branch
      %32 = sbr.rel (0) target = $region25
    $region24: #{tpu_custom_call.1} parent=1 // pred_region
      _
    $region25: #{tpu_custom_call.1} parent=1 // pred_fallthru
      _
    // Predicated region
    $region26: #{tpu_custom_call.1} parent=1 // pred_check
      _
    $region27: #{tpu_custom_call.1} parent=1 // pred_check_branch
      %34 = sbr.rel (0) target = $region29
    $region28: #{tpu_custom_call.1} parent=1 // pred_region
      _
    $region29: #{tpu_custom_call.1} parent=1 // pred_fallthru
      _
    // Predicated region
    $region30: #{tpu_custom_call.1} parent=1 // pred_check
      _
    $region31: #{tpu_custom_call.1} parent=1 // pred_check_branch
      %36 = sbr.rel (0) target = $region33
    $region32: #{tpu_custom_call.1} parent=1 // pred_region
      _
    $region33: #{tpu_custom_call.1} parent=1 // pred_fallthru
      _
    // Predicated region
    $region34: #{tpu_custom_call.1} parent=1 // pred_check
      _
    $region35: #{tpu_custom_call.1} parent=1 // pred_check_branch
      %38 = sbr.rel (0) target = $region37
    $region36: #{tpu_custom_call.1} parent=1 // pred_region
      _
    $region37: #{tpu_custom_call.1} parent=1 // pred_fallthru
      _
    // Predicated region
    $region38: #{tpu_custom_call.1} parent=1 // pred_check
      _
    $region39: #{tpu_custom_call.1} parent=1 // pred_check_branch
      %40 = sbr.rel (0) target = $region41
    $region40: #{tpu_custom_call.1} parent=1 // pred_region
      _
    $region41: #{tpu_custom_call.1} parent=1 // pred_fallthru
      _
    // Predicated region
    $region42: #{tpu_custom_call.1} parent=1 // pred_check
      _
    $region43: #{tpu_custom_call.1} parent=1 // pred_check_branch
      %42 = sbr.rel (0) target = $region45
    $region44: #{tpu_custom_call.1} parent=1 // pred_region
      _
    $region45: #{tpu_custom_call.1} parent=1 // pred_fallthru
      _
    // Predicated region
    $region46: #{tpu_custom_call.1} parent=1 // pred_check
      _
    $region47: #{tpu_custom_call.1} parent=1 // pred_check_branch
      %44 = sbr.rel (0) target = $region49
    $region48: #{tpu_custom_call.1} parent=1 // pred_region
      _
    $region49: #{tpu_custom_call.1} parent=1 // pred_fallthru
      _
    // Predicated region
    $region50: #{tpu_custom_call.1} parent=1 // pred_check
      _
    $region51: #{tpu_custom_call.1} parent=1 // pred_check_branch
      %46 = sbr.rel (0) target = $region53
    $region52: #{tpu_custom_call.1} parent=1 // pred_region
      _
    $region53: #{tpu_custom_call.1} parent=1 // pred_fallthru
      _
    // Predicated region
    $region54: #{tpu_custom_call.1} parent=1 // pred_check
      _
    $region55: #{tpu_custom_call.1} parent=1 // pred_check_branch
      %48 = sbr.rel (0) target = $region57
    $region56: #{tpu_custom_call.1} parent=1 // pred_region
      _
    $region57: #{tpu_custom_call.1} parent=1 // pred_fallthru
      _
    // Predicated region
    $region58: #{tpu_custom_call.1} parent=1 // pred_check
      _
    $region59: #{tpu_custom_call.1} parent=1 // pred_check_branch
      %50 = sbr.rel (0) target = $region61
    $region60: #{tpu_custom_call.1} parent=1 // pred_region
      _
    $region61: #{tpu_custom_call.1} parent=1 // pred_fallthru
      _
    %v51 = vld [vmem:[%s0] sm:$0xff]
    %v52 = vld [vmem:[%s0 + $0x8] sm:$0xff]
    %v53 = vcombine.high %v51, 0.0
    %v55 = vunpack.c.l.s4 1983009808
    %v56 = vunpack.c.0.s8 %v55
    %v57 = vlaneseq
    %v58 = vshrl.u32 %v57, 7
    %v59 = vsub.s32 %v56, %v58
    %v60 = vrot.slane %v51, %v59
    %v62 = vunpack.c.l.s4 1983009808
    %v63 = vunpack.c.0.s8 %v62
    %v64 = vlaneseq
    %v65 = vshrl.u32 %v64, 7
    %v66 = vsub.s32 %v63, %v65
    %v67 = vrot.slane %v53, %v66
    %v68 = vcombine.high %v52, 0.0
    %v70 = vunpack.c.l.s4 1983009808
    %v71 = vunpack.c.0.s8 %v70
    %v72 = vlaneseq
    %v73 = vshrl.u32 %v72, 7
    %v74 = vsub.s32 %v71, %v73
    %v75 = vrot.slane %v52, %v74
    %v77 = vunpack.c.l.s4 1983009808
    %v78 = vunpack.c.0.s8 %v77
    %v79 = vlaneseq
    %v80 = vshrl.u32 %v79, 7
    %v81 = vsub.s32 %v78, %v80
    %v82 = vrot.slane %v68, %v81
    %v83 = vcombine.low %v60, %v75
    %v84 = vcombine.high %v60, %v75
    %v86 = vunpack.c.l.s4 1934713408
    %v87 = vunpack.c.0.s8 %v86
    %v88 = vlaneseq
    %v89 = vshrl.u32 %v88, 7
    %v90 = vsub.s32 %v87, %v89
    %v91 = vrot.slane %v83, %v90
    %v93 = vunpack.c.l.s4 1934713408
    %v94 = vunpack.c.0.s8 %v93
    %v95 = vlaneseq
    %v96 = vshrl.u32 %v95, 7
    %v97 = vsub.s32 %v94, %v96
    %v98 = vrot.slane %v84, %v97
    %v99 = vcombine.low %v67, %v82
    %v100 = vcombine.high %v67, %v82
    %v102 = vunpack.c.l.s4 1934713408
    %v103 = vunpack.c.0.s8 %v102
    %v104 = vlaneseq
    %v105 = vshrl.u32 %v104, 7
    %v106 = vsub.s32 %v103, %v105
    %v107 = vrot.slane %v99, %v106
    %v109 = vunpack.c.l.s4 1934713408
    %v110 = vunpack.c.0.s8 %v109
    %v111 = vlaneseq
    %v112 = vshrl.u32 %v111, 7
    %v113 = vsub.s32 %v110, %v112
    %v114 = vrot.slane %v100, %v113
    %v115 = vcombine.high %v91, 0.0
    %v116 = vcombine.high %v98, 0.0
    %v117 = vcombine.high %v107, 0.0
    %v118 = vcombine.high %v114, 0.0
    %v119 = vld [vmem:[%s1] sm:$0xff]
    %v120 = vld [vmem:[%s1 + $0x8] sm:$0xff]
    %v121 = vld [vmem:[%s1 + $0x10] sm:$0xff]
    %v122 = vld [vmem:[%s1 + $0x18] sm:$0xff]
    %v123 = vld [vmem:[%s2] sm:$0x3]
    %v125 = vlaneseq
    %v126 = vshrl.u32 %v125, 7
    %v127 = vsub.s32 0, %v126
    %v128 = vrot.slane %v123, %v127
    %v129 = vlaneseq
    %v130 = vshrl.u32 %v129, 7
    %v131 = vsub.s32 1, %v130
    %v132 = vrot.slane %v123, %v131
    %v143 = vcombine.low %v91, %v115
    %v144 = vcombine.low %v98, %v116
    %v146 = vunpack.c.l.s4 1983009808
    %v147 = vunpack.c.0.s8 %v146
    %v148 = vlaneseq
    %v149 = vshrl.u32 %v148, 7
    %v150 = vsub.s32 %v147, %v149
    %v151 = vrot.slane %v143, %v150
    %v153 = vunpack.c.l.s4 1983009808
    %v154 = vunpack.c.0.s8 %v153
    %v155 = vlaneseq
    %v156 = vshrl.u32 %v155, 7
    %v157 = vsub.s32 %v154, %v156
    %v158 = vrot.slane %v144, %v157
    %v159 = vcombine.low %v151, %v158
    %v160 = vcombine.low %v107, %v117
    %v161 = vcombine.low %v114, %v118
    %v163 = vunpack.c.l.s4 1983009808
    %v164 = vunpack.c.0.s8 %v163
    %v165 = vlaneseq
    %v166 = vshrl.u32 %v165, 7
    %v167 = vsub.s32 %v164, %v166
    %v168 = vrot.slane %v160, %v167
    %v170 = vunpack.c.l.s4 1983009808
    %v171 = vunpack.c.0.s8 %v170
    %v172 = vlaneseq
    %v173 = vshrl.u32 %v172, 7
    %v174 = vsub.s32 %v171, %v173
    %v175 = vrot.slane %v161, %v174
    %v176 = vcombine.low %v168, %v175
    %vm177 = vcmask 130048
    %v178 = vsel %vm177, %v159, 0
    %v180 = vsel %vm177, %v176, 0
    %182 = vmatprep.subr.mxu0 0.0
    %183 = vmatpush1.msra.mxu0 0.0
    %184 = vmatprep.subr.mxu0 0.0
    %185 = vmatpush1.msra.mxu0 0.0
    %186 = vmatprep.subr.mxu0 0.0
    %187 = vmatpush1.msra.mxu0 0.0
    %188 = vmatprep.subr.mxu0 0.0
    %189 = vmatpush1.msra.mxu0 0.0
    %190 = vmatprep.subr.mxu0 0.0
    %191 = vmatpush1.msra.mxu0 0.0
    %192 = vmatprep.subr.mxu0 0.0
    %193 = vmatpush1.msra.mxu0 0.0
    %194 = vmatprep.subr.mxu0 0.0
    %195 = vmatpush1.msra.mxu0 0.0
    %196 = vmatprep.subr.mxu0 0.0
    %197 = vmatpush1.msra.mxu0 0.0
    %198 = vmatprep.subr.mxu0 0.0
    %199 = vmatpush1.msra.mxu0 0.0
    %200 = vmatprep.subr.mxu0 0.0
    %201 = vmatpush1.msra.mxu0 0.0
    %202 = vmatprep.subr.mxu0 0.0
    %203 = vmatpush1.msra.mxu0 0.0
    %204 = vmatprep.subr.mxu0 0.0
    %205 = vmatpush1.msra.mxu0 0.0
    %206 = vmatprep.subr.mxu0 0.0
    %207 = vmatpush1.msra.mxu0 0.0
    %208 = vmatprep.subr.mxu0 0.0
    %209 = vmatpush1.msra.mxu0 0.0
    %210 = vmatprep.subr.mxu0 %v122
    %211 = vmatpush1.msra.mxu0 %v121
    %212 = vmatprep.subr.mxu0 %v120
    %213 = vmatpush1.msra.mxu0 %v119
    %214 = vmatprep.subr.mxu0 0.0
    %215 = vmatpush2.msra.mxu0 0.0
    %216 = vmatprep.subr.mxu0 0.0
    %217 = vmatpush2.msra.mxu0 0.0
    %218 = vmatprep.subr.mxu0 0.0
    %219 = vmatpush2.msra.mxu0 0.0
    %220 = vmatprep.subr.mxu0 0.0
    %221 = vmatpush2.msra.mxu0 0.0
    %222 = vmatprep.subr.mxu0 0.0
    %223 = vmatpush2.msra.mxu0 0.0
    %224 = vmatprep.subr.mxu0 0.0
    %225 = vmatpush2.msra.mxu0 0.0
    %226 = vmatprep.subr.mxu0 0.0
    %227 = vmatpush2.msra.mxu0 0.0
    %228 = vmatprep.subr.mxu0 0.0
    %229 = vmatpush2.msra.mxu0 0.0
    %230 = vmatprep.subr.mxu0 0.0
    %231 = vmatpush2.msra.mxu0 0.0
    %232 = vmatprep.subr.mxu0 0.0
    %233 = vmatpush2.msra.mxu0 0.0
    %234 = vmatprep.subr.mxu0 0.0
    %235 = vmatpush2.msra.mxu0 0.0
    %236 = vmatprep.subr.mxu0 0.0
    %237 = vmatpush2.msra.mxu0 0.0
    %238 = vmatprep.subr.mxu0 0.0
    %239 = vmatpush2.msra.mxu0 0.0
    %240 = vmatprep.subr.mxu0 0.0
    %241 = vmatpush2.msra.mxu0 0.0
    %242 = vmatprep.subr.mxu0 0.0
    %243 = vmatpush2.msra.mxu0 0.0
    %244 = vmatprep.subr.mxu0 0.0
    %245 = vmatpush2.msra.mxu0 0.0
    %246 = vmatprep.mubr.f32.mxu0 0.0
    %247 = vmatmul.mubr.f32.gmra.mxu0 %v178
    %v248 = vpop.f32.mrf.mxu0
    %v249 = vadd.f32 %v128, %v248
    %v250 = vpop.f32.mrf.mxu0
    %v251 = vadd.f32 %v132, %v250
    %252 = vmatprep.mubr.f32.mxu0 0.0
    %253 = vmatmul.mubr.f32.gmra.mxu0 %v180
    %v254 = vpop.f32.mrf.mxu0
    %v255 = vadd.f32 %v128, %v254
    %v256 = vpop.f32.mrf.mxu0
    %v257 = vadd.f32 %v132, %v256
    %258 = vdwg.mxu0
    %v263 = vcombine.low %v249, %v251
    %v264 = vcombine.high %v249, %v251
    %v266 = vunpack.c.l.s4 1983009808
    %v267 = vunpack.c.0.s8 %v266
    %v268 = vlaneseq
    %v269 = vshrl.u32 %v268, 7
    %v270 = vsub.s32 %v267, %v269
    %v271 = vrot.slane %v263, %v270
    %v273 = vunpack.c.l.s4 1983009808
    %v274 = vunpack.c.0.s8 %v273
    %v275 = vlaneseq
    %v276 = vshrl.u32 %v275, 7
    %v277 = vsub.s32 %v274, %v276
    %v278 = vrot.slane %v264, %v277
    %v279 = vcombine.high %v271, %v271
    %v280 = vcombine.high %v278, %v278
    %v281 = vcombine.low %v255, %v257
    %v282 = vcombine.high %v255, %v257
    %v284 = vunpack.c.l.s4 1983009808
    %v285 = vunpack.c.0.s8 %v284
    %v286 = vlaneseq
    %v287 = vshrl.u32 %v286, 7
    %v288 = vsub.s32 %v285, %v287
    %v289 = vrot.slane %v281, %v288
    %v291 = vunpack.c.l.s4 1983009808
    %v292 = vunpack.c.0.s8 %v291
    %v293 = vlaneseq
    %v294 = vshrl.u32 %v293, 7
    %v295 = vsub.s32 %v292, %v294
    %v296 = vrot.slane %v282, %v295
    %v297 = vcombine.high %v289, %v289
    %v298 = vcombine.high %v296, %v296
    %vm307 = vcmask 1041408
    %vm308 = vcmask 519170
    %vm309 = vmor %vm308, %vm307
    %310 = vst.msk [vmem:[#allocation2] sm:$0xf] %vm309, %v271
    %311 = vst.msk [vmem:[#allocation2 + $0x4] sm:$0xf] %vm309, %v279
    %312 = vst.msk [vmem:[#allocation2 + $0x8] sm:$0xf] %vm309, %v278
    %313 = vst.msk [vmem:[#allocation2 + $0xc] sm:$0xf] %vm309, %v280
    %314 = vst.msk [vmem:[#allocation2 + $0x10] sm:$0xf] %vm309, %v289
    %315 = vst.msk [vmem:[#allocation2 + $0x14] sm:$0xf] %vm309, %v297
    %316 = vst.msk [vmem:[#allocation2 + $0x18] sm:$0xf] %vm309, %v296
    %317 = vst.msk [vmem:[#allocation2 + $0x1c] sm:$0xf] %vm309, %v298
    %v318 = vld [vmem:[%s3] sm:$0xff]
    %v319 = vld [vmem:[%s3 + $0x8] sm:$0xff]
    %v320 = vld [vmem:[%s3 + $0x10] sm:$0xff]
    %v321 = vld [vmem:[%s3 + $0x18] sm:$0xff]
    %v322 = vld [vmem:[%s4] sm:$0x1]
    %v323 = vld [vmem:[%s5] sm:$0xff]
    %v324 = vld [vmem:[%s5 + $0x8] sm:$0xff]
    %v325 = vld [vmem:[%s5 + $0x10] sm:$0xff]
    %v326 = vld [vmem:[%s5 + $0x18] sm:$0xff]
    %v327 = vld [vmem:[%s6] sm:$0x1]
    loop: start=0, step=1, limit=8
    $region62: #{tpu_custom_call.1} parent=1 // loop_pre_header
      _
    $region63: #{tpu_custom_call.1} parent=1 // loop_header
      %s329 = sphi 0, %s333
      %p330 = scmp.ge.s32.totalorder %s329, 8
      %v334 = vphi 0.0, %v460
    $region64: #{tpu_custom_call.1} parent=1 // loop_header_branch
      %332 = sbr.rel (%p330) target = $region68
    $region65: #{tpu_custom_call.1} parent=1 // loop_body
      %s335 = smul.u32 %s329, 2
      %s336 = smul.addr %s335, 2
      %s337 = scalar_lea.vmem [#allocation2], %s336
      %v338 = vld [vmem:[%s337] sm:$0xf]
      %v340 = vlaneseq
      %v341 = vshrl.u32 %v340, 7
      %v342 = vsub.s32 0, %v341
      %v343 = vrot.slane %v322, %v342
      %v347 = vunpack.c.l.s4 1983009808
      %v348 = vunpack.c.0.s8 %v347
      %v349 = vlaneseq
      %v350 = vshrl.u32 %v349, 7
      %v351 = vsub.s32 %v348, %v350
      %v352 = vrot.slane %v334, %v351
      %353 = vrot.lane.b32.xlu0 %v352, 96
      %v354 = vpop.permute.xlu0 %353
      %vm355 = vcmask 261120
      %v356 = vsel %vm355, %v354, 0
      %358 = vmatprep.subr.mxu0 0.0
      %359 = vmatpush1.msra.mxu0 0.0
      %360 = vmatprep.subr.mxu0 0.0
      %361 = vmatpush1.msra.mxu0 0.0
      %362 = vmatprep.subr.mxu0 0.0
      %363 = vmatpush1.msra.mxu0 0.0
      %364 = vmatprep.subr.mxu0 0.0
      %365 = vmatpush1.msra.mxu0 0.0
      %366 = vmatprep.subr.mxu0 0.0
      %367 = vmatpush1.msra.mxu0 0.0
      %368 = vmatprep.subr.mxu0 0.0
      %369 = vmatpush1.msra.mxu0 0.0
      %370 = vmatprep.subr.mxu0 0.0
      %371 = vmatpush1.msra.mxu0 0.0
      %372 = vmatprep.subr.mxu0 0.0
      %373 = vmatpush1.msra.mxu0 0.0
      %374 = vmatprep.subr.mxu0 0.0
      %375 = vmatpush1.msra.mxu0 0.0
      %376 = vmatprep.subr.mxu0 0.0
      %377 = vmatpush1.msra.mxu0 0.0
      %378 = vmatprep.subr.mxu0 0.0
      %379 = vmatpush1.msra.mxu0 0.0
      %380 = vmatprep.subr.mxu0 0.0
      %381 = vmatpush1.msra.mxu0 0.0
      %382 = vmatprep.subr.mxu0 0.0
      %383 = vmatpush1.msra.mxu0 %v321
      %384 = vmatprep.subr.mxu0 0.0
      %385 = vmatpush1.msra.mxu0 %v320
      %386 = vmatprep.subr.mxu0 0.0
      %387 = vmatpush1.msra.mxu0 %v319
      %388 = vmatprep.subr.mxu0 0.0
      %389 = vmatpush1.msra.mxu0 %v318
      %390 = vmatprep.subr.mxu0 0.0
      %391 = vmatpush2.msra.mxu0 0.0
      %392 = vmatprep.subr.mxu0 0.0
      %393 = vmatpush2.msra.mxu0 0.0
      %394 = vmatprep.subr.mxu0 0.0
      %395 = vmatpush2.msra.mxu0 0.0
      %396 = vmatprep.subr.mxu0 0.0
      %397 = vmatpush2.msra.mxu0 0.0
      %398 = vmatprep.subr.mxu0 0.0
      %399 = vmatpush2.msra.mxu0 0.0
      %400 = vmatprep.subr.mxu0 0.0
      %401 = vmatpush2.msra.mxu0 0.0
      %402 = vmatprep.subr.mxu0 0.0
      %403 = vmatpush2.msra.mxu0 0.0
      %404 = vmatprep.subr.mxu0 0.0
      %405 = vmatpush2.msra.mxu0 0.0
      %406 = vmatprep.subr.mxu0 0.0
      %407 = vmatpush2.msra.mxu0 0.0
      %408 = vmatprep.subr.mxu0 0.0
      %409 = vmatpush2.msra.mxu0 0.0
      %410 = vmatprep.subr.mxu0 0.0
      %411 = vmatpush2.msra.mxu0 0.0
      %412 = vmatprep.subr.mxu0 0.0
      %413 = vmatpush2.msra.mxu0 0.0
      %414 = vmatprep.subr.mxu0 0.0
      %415 = vmatpush2.msra.mxu0 0.0
      %416 = vmatprep.subr.mxu0 0.0
      %417 = vmatpush2.msra.mxu0 0.0
      %418 = vmatprep.subr.mxu0 0.0
      %419 = vmatpush2.msra.mxu0 0.0
      %420 = vmatprep.subr.mxu0 0.0
      %421 = vmatpush2.msra.mxu0 0.0
      %422 = vmatprep.mubr.f32.mxu0 0.0
      %423 = vmatmul.mubr.f32.gmra.mxu0 %v356
      %v424 = vpop.f32.mrf.mxu0
      %v425 = vadd.f32 %v343, %v424
      %v426 = vpop.f32.mrf.mxu0
      %427 = vdwg.mxu0
      %v428 = vadd.f32 %v338, %v425
      %v429 = vsub.f32 0.0, %v428
      %v430 = vmul.f32 %v429, 1.442695
      %v431 = vpow.pop %v430
      %v432 = vadd.f32 %v431, 1.0
      %v433 = vrcp.pop %v432
      %v434 = vmul.f32 1.0, %v433
      %v437 = vunpack.c.l.s4 1983009808
      %v438 = vunpack.c.0.s8 %v437
      %v439 = vlaneseq
      %v440 = vshrl.u32 %v439, 7
      %v441 = vsub.s32 %v438, %v440
      %v442 = vrot.slane %v425, %v441
      %443 = vrot.lane.b32.xlu0 %v442, 64
      %v444 = vpop.permute.xlu0 %443
      %v446 = vmul.f32 %v434, %v444
      %448 = vrot.lane.b32.xlu0 %v446, 64
      %v449 = vpop.permute.xlu0 %448
      %v451 = vadd.f32 %v338, %v449
      %v452 = vtanh.pop %v451
      %v453 = vsub.f32 1.0, %v434
      %455 = vrot.lane.b32.xlu0 %v452, 96
      %v456 = vpop.permute.xlu0 %455
      %v458 = vmul.f32 %v453, %v456
      %v459 = vmul.f32 %v434, %v334
      %v460 = vadd.f32 %v458, %v459
      %v463 = vunpack.c.l.s4 1983009808
      %v464 = vunpack.c.0.s8 %v463
      %v465 = vlaneseq
      %v466 = vshrl.u32 %v465, 7
      %v467 = vsub.s32 %v464, %v466
      %v468 = vrot.slane %v460, %v467
      %469 = vrot.lane.b32.xlu0 %v468, 96
      %v470 = vpop.permute.xlu0 %469
      %s472 = scalar_lea.vmem [#allocation3], %s335
      %vm473 = vcmask 254976
      %474 = vst.msk [vmem:[%s472] sm:$0x3] %vm473, %v470
    $region66: #{tpu_custom_call.1} parent=1 // loop_footer
      %s333 = sadd.s32 1, %s329
    $region67: #{tpu_custom_call.1} parent=1 // loop_footer_branch
      %328 = sbr.rel target = $region63
    $region68: #{tpu_custom_call.1} parent=1 // loop_exit
      _
    loop: start=0, step=1, limit=8
    $region69: #{tpu_custom_call.1} parent=1 // loop_pre_header
      _
    $region70: #{tpu_custom_call.1} parent=1 // loop_header
      %s476 = sphi 0, %s480
      %p477 = scmp.ge.s32.totalorder %s476, 8
      %v481 = vphi 0.0, %v612
    $region71: #{tpu_custom_call.1} parent=1 // loop_header_branch
      %479 = sbr.rel (%p477) target = $region75
    $region72: #{tpu_custom_call.1} parent=1 // loop_body
      %s482 = ssub.s32 7, %s476
      %s483 = smul.u32 %s482, 2
      %s484 = smul.addr %s483, 2
      %s485 = scalar_lea.vmem [#allocation2], %s484
      %v486 = vld [vmem:[%s485] sm:$0xf]
      %v488 = vlaneseq
      %v489 = vshrl.u32 %v488, 7
      %v490 = vsub.s32 0, %v489
      %v491 = vrot.slane %v327, %v490
      %vm493 = vcmask 261120
      %v495 = vsel %vm493, %v481, 0
      %497 = vmatprep.subr.mxu0 0.0
      %498 = vmatpush1.msra.mxu0 0.0
      %499 = vmatprep.subr.mxu0 0.0
      %500 = vmatpush1.msra.mxu0 0.0
      %501 = vmatprep.subr.mxu0 0.0
      %502 = vmatpush1.msra.mxu0 0.0
      %503 = vmatprep.subr.mxu0 0.0
      %504 = vmatpush1.msra.mxu0 0.0
      %505 = vmatprep.subr.mxu0 0.0
      %506 = vmatpush1.msra.mxu0 0.0
      %507 = vmatprep.subr.mxu0 0.0
      %508 = vmatpush1.msra.mxu0 0.0
      %509 = vmatprep.subr.mxu0 0.0
      %510 = vmatpush1.msra.mxu0 0.0
      %511 = vmatprep.subr.mxu0 0.0
      %512 = vmatpush1.msra.mxu0 0.0
      %513 = vmatprep.subr.mxu0 0.0
      %514 = vmatpush1.msra.mxu0 0.0
      %515 = vmatprep.subr.mxu0 0.0
      %516 = vmatpush1.msra.mxu0 0.0
      %517 = vmatprep.subr.mxu0 0.0
      %518 = vmatpush1.msra.mxu0 0.0
      %519 = vmatprep.subr.mxu0 0.0
      %520 = vmatpush1.msra.mxu0 0.0
      %521 = vmatprep.subr.mxu0 0.0
      %522 = vmatpush1.msra.mxu0 %v326
      %523 = vmatprep.subr.mxu0 0.0
      %524 = vmatpush1.msra.mxu0 %v325
      %525 = vmatprep.subr.mxu0 0.0
      %526 = vmatpush1.msra.mxu0 %v324
      %527 = vmatprep.subr.mxu0 0.0
      %528 = vmatpush1.msra.mxu0 %v323
      %529 = vmatprep.subr.mxu0 0.0
      %530 = vmatpush2.msra.mxu0 0.0
      %531 = vmatprep.subr.mxu0 0.0
      %532 = vmatpush2.msra.mxu0 0.0
      %533 = vmatprep.subr.mxu0 0.0
      %534 = vmatpush2.msra.mxu0 0.0
      %535 = vmatprep.subr.mxu0 0.0
      %536 = vmatpush2.msra.mxu0 0.0
      %537 = vmatprep.subr.mxu0 0.0
      %538 = vmatpush2.msra.mxu0 0.0
      %539 = vmatprep.subr.mxu0 0.0
      %540 = vmatpush2.msra.mxu0 0.0
      %541 = vmatprep.subr.mxu0 0.0
      %542 = vmatpush2.msra.mxu0 0.0
      %543 = vmatprep.subr.mxu0 0.0
      %544 = vmatpush2.msra.mxu0 0.0
      %545 = vmatprep.subr.mxu0 0.0
      %546 = vmatpush2.msra.mxu0 0.0
      %547 = vmatprep.subr.mxu0 0.0
      %548 = vmatpush2.msra.mxu0 0.0
      %549 = vmatprep.subr.mxu0 0.0
      %550 = vmatpush2.msra.mxu0 0.0
      %551 = vmatprep.subr.mxu0 0.0
      %552 = vmatpush2.msra.mxu0 0.0
      %553 = vmatprep.subr.mxu0 0.0
      %554 = vmatpush2.msra.mxu0 0.0
      %555 = vmatprep.subr.mxu0 0.0
      %556 = vmatpush2.msra.mxu0 0.0
      %557 = vmatprep.subr.mxu0 0.0
      %558 = vmatpush2.msra.mxu0 0.0
      %559 = vmatprep.subr.mxu0 0.0
      %560 = vmatpush2.msra.mxu0 0.0
      %561 = vmatprep.mubr.f32.mxu0 0.0
      %562 = vmatmul.mubr.f32.gmra.mxu0 %v495
      %v563 = vpop.f32.mrf.mxu0
      %v564 = vadd.f32 %v491, %v563
      %v565 = vpop.f32.mrf.mxu0
      %566 = vdwg.mxu0
      %v569 = vunpack.c.l.s4 1983009808
      %v570 = vunpack.c.0.s8 %v569
      %v571 = vlaneseq
      %v572 = vshrl.u32 %v571, 7
      %v573 = vsub.s32 %v570, %v572
      %v574 = vrot.slane %v564, %v573
      %575 = vrot.lane.b32.xlu0 %v574, 96
      %v576 = vpop.permute.xlu0 %575
      %v578 = vadd.f32 %v486, %v576
      %v579 = vsub.f32 0.0, %v578
      %v580 = vmul.f32 %v579, 1.442695
      %v581 = vpow.pop %v580
      %v582 = vadd.f32 %v581, 1.0
      %v583 = vrcp.pop %v582
      %v584 = vmul.f32 1.0, %v583
      %v586 = vrot.slane %v486, 2
      %v588 = vadd.f32 %v586, %v576
      %v589 = vsub.f32 0.0, %v588
      %v590 = vmul.f32 %v589, 1.442695
      %v591 = vpow.pop %v590
      %v592 = vadd.f32 %v591, 1.0
      %v593 = vrcp.pop %v592
      %v594 = vmul.f32 1.0, %v593
      %595 = vrot.lane.b32.xlu0 %v574, 32
      %v596 = vpop.permute.xlu0 %595
      %v598 = vmul.f32 %v584, %v596
      %599 = vrot.lane.b32.xlu0 %v486, 96
      %v600 = vpop.permute.xlu0 %599
      %v601 = vrot.slane %v600, 2
      %604 = vrot.lane.b32.xlu0 %v598, 32
      %v605 = vpop.permute.xlu0 %604
      %v607 = vadd.f32 %v601, %v605
      %v608 = vtanh.pop %v607
      %v609 = vsub.f32 1.0, %v594
      %v610 = vmul.f32 %v609, %v608
      %v611 = vmul.f32 %v594, %v481
      %v612 = vadd.f32 %v610, %v611
      %s613 = scalar_lea.vmem [#allocation4], %s483
      %vm614 = vcmask 254976
      %615 = vst.msk [vmem:[%s613] sm:$0x3] %vm614, %v612
    $region73: #{tpu_custom_call.1} parent=1 // loop_footer
      %s480 = sadd.s32 1, %s476
    $region74: #{tpu_custom_call.1} parent=1 // loop_footer_branch
      %475 = sbr.rel target = $region70
    $region75: #{tpu_custom_call.1} parent=1 // loop_exit
      _
    %v616 = vld [vmem:[#allocation3] sm:$0x3]
    %v617 = vld [vmem:[#allocation3 + $0x2] sm:$0x3]
    %v618 = vld [vmem:[#allocation3 + $0x4] sm:$0x3]
    %v619 = vld [vmem:[#allocation3 + $0x6] sm:$0x3]
    %v620 = vld [vmem:[#allocation3 + $0x8] sm:$0x3]
    %v621 = vld [vmem:[#allocation3 + $0xa] sm:$0x3]
    %v622 = vld [vmem:[#allocation3 + $0xc] sm:$0x3]
    %v623 = vld [vmem:[#allocation3 + $0xe] sm:$0x3]
    %v624 = vld [vmem:[#allocation4] sm:$0x3]
    %v625 = vld [vmem:[#allocation4 + $0x2] sm:$0x3]
    %v626 = vld [vmem:[#allocation4 + $0x4] sm:$0x3]
    %v627 = vld [vmem:[#allocation4 + $0x6] sm:$0x3]
    %v628 = vld [vmem:[#allocation4 + $0x8] sm:$0x3]
    %v629 = vld [vmem:[#allocation4 + $0xa] sm:$0x3]
    %v630 = vld [vmem:[#allocation4 + $0xc] sm:$0x3]
    %v631 = vld [vmem:[#allocation4 + $0xe] sm:$0x3]
    %640 = vrot.lane.b32.xlu0 %v624, 32
    %v641 = vpop.permute.xlu0 %640
    %642 = vrot.lane.b32.xlu0 %v625, 32
    %v643 = vpop.permute.xlu0 %642
    %644 = vrot.lane.b32.xlu0 %v626, 32
    %v645 = vpop.permute.xlu0 %644
    %646 = vrot.lane.b32.xlu0 %v627, 32
    %v647 = vpop.permute.xlu0 %646
    %648 = vrot.lane.b32.xlu0 %v628, 32
    %v649 = vpop.permute.xlu0 %648
    %650 = vrot.lane.b32.xlu0 %v629, 32
    %v651 = vpop.permute.xlu0 %650
    %652 = vrot.lane.b32.xlu0 %v630, 32
    %v653 = vpop.permute.xlu0 %652
    %654 = vrot.lane.b32.xlu0 %v631, 32
    %v655 = vpop.permute.xlu0 %654
    %vm664 = vcmask 261120
    %v665 = vsel %vm664, %v616, %v641
    %v666 = vsel %vm664, %v617, %v643
    %v667 = vsel %vm664, %v618, %v645
    %v668 = vsel %vm664, %v619, %v647
    %v669 = vsel %vm664, %v620, %v649
    %v670 = vsel %vm664, %v621, %v651
    %v671 = vsel %vm664, %v622, %v653
    %v672 = vsel %vm664, %v623, %v655
    %v673 = vld [vmem:[%s7] sm:$0xff]
    %v674 = vld [vmem:[%s7 + $0x8] sm:$0xff]
    %v675 = vld [vmem:[%s7 + $0x10] sm:$0xff]
    %v676 = vld [vmem:[%s7 + $0x18] sm:$0xff]
    %v677 = vld [vmem:[%s7 + $0x20] sm:$0xff]
    %v678 = vld [vmem:[%s7 + $0x28] sm:$0xff]
    %v679 = vld [vmem:[%s7 + $0x30] sm:$0xff]
    %v680 = vld [vmem:[%s7 + $0x38] sm:$0xff]
    %v681 = vld [vmem:[%s8] sm:$0x1]
    %v683 = vlaneseq
    %v684 = vshrl.u32 %v683, 7
    %v685 = vsub.s32 0, %v684
    %v686 = vrot.slane %v681, %v685
    %v696 = vcombine.low %v665, %v666
    %v697 = vcombine.low %v667, %v668
    %v699 = vunpack.c.l.s4 1983009808
    %v700 = vunpack.c.0.s8 %v699
    %v701 = vlaneseq
    %v702 = vshrl.u32 %v701, 7
    %v703 = vsub.s32 %v700, %v702
    %v704 = vrot.slane %v696, %v703
    %v706 = vunpack.c.l.s4 1983009808
    %v707 = vunpack.c.0.s8 %v706
    %v708 = vlaneseq
    %v709 = vshrl.u32 %v708, 7
    %v710 = vsub.s32 %v707, %v709
    %v711 = vrot.slane %v697, %v710
    %v712 = vcombine.low %v704, %v711
    %v713 = vcombine.low %v669, %v670
    %v714 = vcombine.low %v671, %v672
    %v716 = vunpack.c.l.s4 1983009808
    %v717 = vunpack.c.0.s8 %v716
    %v718 = vlaneseq
    %v719 = vshrl.u32 %v718, 7
    %v720 = vsub.s32 %v717, %v719
    %v721 = vrot.slane %v713, %v720
    %v723 = vunpack.c.l.s4 1983009808
    %v724 = vunpack.c.0.s8 %v723
    %v725 = vlaneseq
    %v726 = vshrl.u32 %v725, 7
    %v727 = vsub.s32 %v724, %v726
    %v728 = vrot.slane %v714, %v727
    %v729 = vcombine.low %v721, %v728
    %vm730 = vcmask 523264
    %v731 = vsel %vm730, %v712, 0
    %v733 = vsel %vm730, %v729, 0
    %735 = vmatprep.subr.mxu0 0.0
    %736 = vmatpush1.msra.mxu0 0.0
    %737 = vmatprep.subr.mxu0 0.0
    %738 = vmatpush1.msra.mxu0 0.0
    %739 = vmatprep.subr.mxu0 0.0
    %740 = vmatpush1.msra.mxu0 0.0
    %741 = vmatprep.subr.mxu0 0.0
    %742 = vmatpush1.msra.mxu0 0.0
    %743 = vmatprep.subr.mxu0 0.0
    %744 = vmatpush1.msra.mxu0 0.0
    %745 = vmatprep.subr.mxu0 0.0
    %746 = vmatpush1.msra.mxu0 0.0
    %747 = vmatprep.subr.mxu0 0.0
    %748 = vmatpush1.msra.mxu0 0.0
    %749 = vmatprep.subr.mxu0 0.0
    %750 = vmatpush1.msra.mxu0 0.0
    %751 = vmatprep.subr.mxu0 0.0
    %752 = vmatpush1.msra.mxu0 %v680
    %753 = vmatprep.subr.mxu0 0.0
    %754 = vmatpush1.msra.mxu0 %v679
    %755 = vmatprep.subr.mxu0 0.0
    %756 = vmatpush1.msra.mxu0 %v678
    %757 = vmatprep.subr.mxu0 0.0
    %758 = vmatpush1.msra.mxu0 %v677
    %759 = vmatprep.subr.mxu0 0.0
    %760 = vmatpush1.msra.mxu0 %v676
    %761 = vmatprep.subr.mxu0 0.0
    %762 = vmatpush1.msra.mxu0 %v675
    %763 = vmatprep.subr.mxu0 0.0
    %764 = vmatpush1.msra.mxu0 %v674
    %765 = vmatprep.subr.mxu0 0.0
    %766 = vmatpush1.msra.mxu0 %v673
    %767 = vmatprep.subr.mxu0 0.0
    %768 = vmatpush2.msra.mxu0 0.0
    %769 = vmatprep.subr.mxu0 0.0
    %770 = vmatpush2.msra.mxu0 0.0
    %771 = vmatprep.subr.mxu0 0.0
    %772 = vmatpush2.msra.mxu0 0.0
    %773 = vmatprep.subr.mxu0 0.0
    %774 = vmatpush2.msra.mxu0 0.0
    %775 = vmatprep.subr.mxu0 0.0
    %776 = vmatpush2.msra.mxu0 0.0
    %777 = vmatprep.subr.mxu0 0.0
    %778 = vmatpush2.msra.mxu0 0.0
    %779 = vmatprep.subr.mxu0 0.0
    %780 = vmatpush2.msra.mxu0 0.0
    %781 = vmatprep.subr.mxu0 0.0
    %782 = vmatpush2.msra.mxu0 0.0
    %783 = vmatprep.subr.mxu0 0.0
    %784 = vmatpush2.msra.mxu0 0.0
    %785 = vmatprep.subr.mxu0 0.0
    %786 = vmatpush2.msra.mxu0 0.0
    %787 = vmatprep.subr.mxu0 0.0
    %788 = vmatpush2.msra.mxu0 0.0
    %789 = vmatprep.subr.mxu0 0.0
    %790 = vmatpush2.msra.mxu0 0.0
    %791 = vmatprep.subr.mxu0 0.0
    %792 = vmatpush2.msra.mxu0 0.0
    %793 = vmatprep.subr.mxu0 0.0
    %794 = vmatpush2.msra.mxu0 0.0
    %795 = vmatprep.subr.mxu0 0.0
    %796 = vmatpush2.msra.mxu0 0.0
    %797 = vmatprep.subr.mxu0 0.0
    %798 = vmatpush2.msra.mxu0 0.0
    %799 = vmatprep.mubr.f32.mxu0 0.0
    %800 = vmatmul.mubr.f32.gmra.mxu0 %v731
    %v801 = vpop.f32.mrf.mxu0
    %v802 = vadd.f32 %v686, %v801
    %v803 = vpop.f32.mrf.mxu0
    %804 = vmatprep.mubr.f32.mxu0 0.0
    %805 = vmatmul.mubr.f32.gmra.mxu0 %v733
    %v806 = vpop.f32.mrf.mxu0
    %v807 = vadd.f32 %v686, %v806
    %v808 = vpop.f32.mrf.mxu0
    %809 = vdwg.mxu0
    %v810 = vld [vmem:[%s9] sm:$0xff]
    %v811 = vld [vmem:[%s9 + $0x8] sm:$0xff]
    %v812 = vld [vmem:[%s9 + $0x10] sm:$0xff]
    %v813 = vld [vmem:[%s9 + $0x18] sm:$0xff]
    %v814 = vld [vmem:[%s9 + $0x20] sm:$0xff]
    %v815 = vld [vmem:[%s9 + $0x28] sm:$0xff]
    %v816 = vld [vmem:[%s9 + $0x30] sm:$0xff]
    %v817 = vld [vmem:[%s9 + $0x38] sm:$0xff]
    %v818 = vld [vmem:[%s10] sm:$0x1]
    %v820 = vlaneseq
    %v821 = vshrl.u32 %v820, 7
    %v822 = vsub.s32 0, %v821
    %v823 = vrot.slane %v818, %v822
    %825 = vmatprep.subr.mxu0 0.0
    %826 = vmatpush1.msra.mxu0 0.0
    %827 = vmatprep.subr.mxu0 0.0
    %828 = vmatpush1.msra.mxu0 0.0
    %829 = vmatprep.subr.mxu0 0.0
    %830 = vmatpush1.msra.mxu0 0.0
    %831 = vmatprep.subr.mxu0 0.0
    %832 = vmatpush1.msra.mxu0 0.0
    %833 = vmatprep.subr.mxu0 0.0
    %834 = vmatpush1.msra.mxu0 0.0
    %835 = vmatprep.subr.mxu0 0.0
    %836 = vmatpush1.msra.mxu0 0.0
    %837 = vmatprep.subr.mxu0 0.0
    %838 = vmatpush1.msra.mxu0 0.0
    %839 = vmatprep.subr.mxu0 0.0
    %840 = vmatpush1.msra.mxu0 0.0
    %841 = vmatprep.subr.mxu0 0.0
    %842 = vmatpush1.msra.mxu0 %v817
    %843 = vmatprep.subr.mxu0 0.0
    %844 = vmatpush1.msra.mxu0 %v816
    %845 = vmatprep.subr.mxu0 0.0
    %846 = vmatpush1.msra.mxu0 %v815
    %847 = vmatprep.subr.mxu0 0.0
    %848 = vmatpush1.msra.mxu0 %v814
    %849 = vmatprep.subr.mxu0 0.0
    %850 = vmatpush1.msra.mxu0 %v813
    %851 = vmatprep.subr.mxu0 0.0
    %852 = vmatpush1.msra.mxu0 %v812
    %853 = vmatprep.subr.mxu0 0.0
    %854 = vmatpush1.msra.mxu0 %v811
    %855 = vmatprep.subr.mxu0 0.0
    %856 = vmatpush1.msra.mxu0 %v810
    %857 = vmatprep.subr.mxu0 0.0
    %858 = vmatpush2.msra.mxu0 0.0
    %859 = vmatprep.subr.mxu0 0.0
    %860 = vmatpush2.msra.mxu0 0.0
    %861 = vmatprep.subr.mxu0 0.0
    %862 = vmatpush2.msra.mxu0 0.0
    %863 = vmatprep.subr.mxu0 0.0
    %864 = vmatpush2.msra.mxu0 0.0
    %865 = vmatprep.subr.mxu0 0.0
    %866 = vmatpush2.msra.mxu0 0.0
    %867 = vmatprep.subr.mxu0 0.0
    %868 = vmatpush2.msra.mxu0 0.0
    %869 = vmatprep.subr.mxu0 0.0
    %870 = vmatpush2.msra.mxu0 0.0
    %871 = vmatprep.subr.mxu0 0.0
    %872 = vmatpush2.msra.mxu0 0.0
    %873 = vmatprep.subr.mxu0 0.0
    %874 = vmatpush2.msra.mxu0 0.0
    %875 = vmatprep.subr.mxu0 0.0
    %876 = vmatpush2.msra.mxu0 0.0
    %877 = vmatprep.subr.mxu0 0.0
    %878 = vmatpush2.msra.mxu0 0.0
    %879 = vmatprep.subr.mxu0 0.0
    %880 = vmatpush2.msra.mxu0 0.0
    %881 = vmatprep.subr.mxu0 0.0
    %882 = vmatpush2.msra.mxu0 0.0
    %883 = vmatprep.subr.mxu0 0.0
    %884 = vmatpush2.msra.mxu0 0.0
    %885 = vmatprep.subr.mxu0 0.0
    %886 = vmatpush2.msra.mxu0 0.0
    %887 = vmatprep.subr.mxu0 0.0
    %888 = vmatpush2.msra.mxu0 0.0
    %889 = vmatprep.mubr.f32.mxu0 0.0
    %890 = vmatmul.mubr.f32.gmra.mxu0 %v731
    %v891 = vpop.f32.mrf.mxu0
    %v892 = vadd.f32 %v823, %v891
    %v893 = vpop.f32.mrf.mxu0
    %894 = vmatprep.mubr.f32.mxu0 0.0
    %895 = vmatmul.mubr.f32.gmra.mxu0 %v733
    %v896 = vpop.f32.mrf.mxu0
    %v897 = vadd.f32 %v823, %v896
    %v898 = vpop.f32.mrf.mxu0
    %899 = vdwg.mxu0
    %v900 = vmax.f32 %v892, 0.0
    %v901 = vmax.f32 %v897, 0.0
    %v902 = vld [vmem:[%s11] sm:$0xff]
    %v903 = vld [vmem:[%s11 + $0x8] sm:$0xff]
    %v904 = vld [vmem:[%s11 + $0x10] sm:$0xff]
    %v905 = vld [vmem:[%s11 + $0x18] sm:$0xff]
    %v906 = vld [vmem:[%s12] sm:$0x1]
    %v908 = vlaneseq
    %v909 = vshrl.u32 %v908, 7
    %v910 = vsub.s32 0, %v909
    %v911 = vrot.slane %v906, %v910
    %v914 = vsel %vm664, %v900, 0
    %v917 = vsel %vm664, %v901, 0
    %919 = vmatprep.subr.mxu0 0.0
    %920 = vmatpush1.msra.mxu0 0.0
    %921 = vmatprep.subr.mxu0 0.0
    %922 = vmatpush1.msra.mxu0 0.0
    %923 = vmatprep.subr.mxu0 0.0
    %924 = vmatpush1.msra.mxu0 0.0
    %925 = vmatprep.subr.mxu0 0.0
    %926 = vmatpush1.msra.mxu0 0.0
    %927 = vmatprep.subr.mxu0 0.0
    %928 = vmatpush1.msra.mxu0 0.0
    %929 = vmatprep.subr.mxu0 0.0
    %930 = vmatpush1.msra.mxu0 0.0
    %931 = vmatprep.subr.mxu0 0.0
    %932 = vmatpush1.msra.mxu0 0.0
    %933 = vmatprep.subr.mxu0 0.0
    %934 = vmatpush1.msra.mxu0 0.0
    %935 = vmatprep.subr.mxu0 0.0
    %936 = vmatpush1.msra.mxu0 0.0
    %937 = vmatprep.subr.mxu0 0.0
    %938 = vmatpush1.msra.mxu0 0.0
    %939 = vmatprep.subr.mxu0 0.0
    %940 = vmatpush1.msra.mxu0 0.0
    %941 = vmatprep.subr.mxu0 0.0
    %942 = vmatpush1.msra.mxu0 0.0
    %943 = vmatprep.subr.mxu0 0.0
    %944 = vmatpush1.msra.mxu0 %v905
    %945 = vmatprep.subr.mxu0 0.0
    %946 = vmatpush1.msra.mxu0 %v904
    %947 = vmatprep.subr.mxu0 0.0
    %948 = vmatpush1.msra.mxu0 %v903
    %949 = vmatprep.subr.mxu0 0.0
    %950 = vmatpush1.msra.mxu0 %v902
    %951 = vmatprep.subr.mxu0 0.0
    %952 = vmatpush2.msra.mxu0 0.0
    %953 = vmatprep.subr.mxu0 0.0
    %954 = vmatpush2.msra.mxu0 0.0
    %955 = vmatprep.subr.mxu0 0.0
    %956 = vmatpush2.msra.mxu0 0.0
    %957 = vmatprep.subr.mxu0 0.0
    %958 = vmatpush2.msra.mxu0 0.0
    %959 = vmatprep.subr.mxu0 0.0
    %960 = vmatpush2.msra.mxu0 0.0
    %961 = vmatprep.subr.mxu0 0.0
    %962 = vmatpush2.msra.mxu0 0.0
    %963 = vmatprep.subr.mxu0 0.0
    %964 = vmatpush2.msra.mxu0 0.0
    %965 = vmatprep.subr.mxu0 0.0
    %966 = vmatpush2.msra.mxu0 0.0
    %967 = vmatprep.subr.mxu0 0.0
    %968 = vmatpush2.msra.mxu0 0.0
    %969 = vmatprep.subr.mxu0 0.0
    %970 = vmatpush2.msra.mxu0 0.0
    %971 = vmatprep.subr.mxu0 0.0
    %972 = vmatpush2.msra.mxu0 0.0
    %973 = vmatprep.subr.mxu0 0.0
    %974 = vmatpush2.msra.mxu0 0.0
    %975 = vmatprep.subr.mxu0 0.0
    %976 = vmatpush2.msra.mxu0 0.0
    %977 = vmatprep.subr.mxu0 0.0
    %978 = vmatpush2.msra.mxu0 0.0
    %979 = vmatprep.subr.mxu0 0.0
    %980 = vmatpush2.msra.mxu0 0.0
    %981 = vmatprep.subr.mxu0 0.0
    %982 = vmatpush2.msra.mxu0 0.0
    %983 = vmatprep.mubr.f32.mxu0 0.0
    %984 = vmatmul.mubr.f32.gmra.mxu0 %v914
    %v985 = vpop.f32.mrf.mxu0
    %v986 = vadd.f32 %v911, %v985
    %v987 = vpop.f32.mrf.mxu0
    %988 = vmatprep.mubr.f32.mxu0 0.0
    %989 = vmatmul.mubr.f32.gmra.mxu0 %v917
    %v990 = vpop.f32.mrf.mxu0
    %v991 = vadd.f32 %v911, %v990
    %v992 = vpop.f32.mrf.mxu0
    %993 = vdwg.mxu0
    %vm994 = vcmask 23552
    %v995 = vsel %vm994, %v986, -inf
    %996 = vmax.xlane.f32.xlu0 %v995
    %v997 = vpop.xlane.xlu0 %996
    %v998 = vsel %vm994, %v991, -inf
    %999 = vmax.xlane.f32.xlu0 %v998
    %v1000 = vpop.xlane.xlu0 %999
    %v1001 = vsub.f32 %v986, %v997
    %v1002 = vsub.f32 %v991, %v1000
    %v1003 = vmul.f32 %v1001, 1.442695
    %v1004 = vpow.pop %v1003
    %v1005 = vmul.f32 %v1002, 1.442695
    %v1006 = vpow.pop %v1005
    %v1007 = vsel %vm994, %v1004, 0.0
    %1008 = vadd.xlane.f32.xlu0 %v1007
    %v1009 = vpop.xlane.xlu0 %1008
    %v1010 = vsel %vm994, %v1006, 0.0
    %1011 = vadd.xlane.f32.xlu0 %v1010
    %v1012 = vpop.xlane.xlu0 %1011
    %v1013 = vrcp.pop %v1009
    %v1014 = vmul.f32 %v1004, %v1013
    %v1015 = vrcp.pop %v1012
    %v1016 = vmul.f32 %v1006, %v1015
    %v1017 = vld [vmem:[%s13] sm:$0x7]
    %v1018 = vld [vmem:[%s14] sm:$0x1]
    %v1020 = vlaneseq
    %v1021 = vshrl.u32 %v1020, 7
    %v1022 = vsub.s32 0, %v1021
    %v1023 = vrot.slane %v1018, %v1022
    %v1026 = vsel %vm994, %v1014, 0
    %v1029 = vsel %vm994, %v1016, 0
    %vm1031 = vcmask 1042432
    %v1033 = vsel %vm1031, %v1017, 0
    %1035 = vmatprep.subr.mxu0 0.0
    %1036 = vmatpush1.msra.mxu0 0.0
    %1037 = vmatprep.subr.mxu0 0.0
    %1038 = vmatpush1.msra.mxu0 0.0
    %1039 = vmatprep.subr.mxu0 0.0
    %1040 = vmatpush1.msra.mxu0 0.0
    %1041 = vmatprep.subr.mxu0 0.0
    %1042 = vmatpush1.msra.mxu0 0.0
    %1043 = vmatprep.subr.mxu0 0.0
    %1044 = vmatpush1.msra.mxu0 0.0
    %1045 = vmatprep.subr.mxu0 0.0
    %1046 = vmatpush1.msra.mxu0 0.0
    %1047 = vmatprep.subr.mxu0 0.0
    %1048 = vmatpush1.msra.mxu0 0.0
    %1049 = vmatprep.subr.mxu0 0.0
    %1050 = vmatpush1.msra.mxu0 0.0
    %1051 = vmatprep.subr.mxu0 0.0
    %1052 = vmatpush1.msra.mxu0 0.0
    %1053 = vmatprep.subr.mxu0 0.0
    %1054 = vmatpush1.msra.mxu0 0.0
    %1055 = vmatprep.subr.mxu0 0.0
    %1056 = vmatpush1.msra.mxu0 0.0
    %1057 = vmatprep.subr.mxu0 0.0
    %1058 = vmatpush1.msra.mxu0 0.0
    %1059 = vmatprep.subr.mxu0 0.0
    %1060 = vmatpush1.msra.mxu0 0.0
    %1061 = vmatprep.subr.mxu0 0.0
    %1062 = vmatpush1.msra.mxu0 0.0
    %1063 = vmatprep.subr.mxu0 0.0
    %1064 = vmatpush1.msra.mxu0 0.0
    %1065 = vmatprep.subr.mxu0 0.0
    %1066 = vmatpush1.msra.mxu0 %v1033
    %1067 = vmatprep.subr.mxu0 0.0
    %1068 = vmatpush2.msra.mxu0 0.0
    %1069 = vmatprep.subr.mxu0 0.0
    %1070 = vmatpush2.msra.mxu0 0.0
    %1071 = vmatprep.subr.mxu0 0.0
    %1072 = vmatpush2.msra.mxu0 0.0
    %1073 = vmatprep.subr.mxu0 0.0
    %1074 = vmatpush2.msra.mxu0 0.0
    %1075 = vmatprep.subr.mxu0 0.0
    %1076 = vmatpush2.msra.mxu0 0.0
    %1077 = vmatprep.subr.mxu0 0.0
    %1078 = vmatpush2.msra.mxu0 0.0
    %1079 = vmatprep.subr.mxu0 0.0
    %1080 = vmatpush2.msra.mxu0 0.0
    %1081 = vmatprep.subr.mxu0 0.0
    %1082 = vmatpush2.msra.mxu0 0.0
    %1083 = vmatprep.subr.mxu0 0.0
    %1084 = vmatpush2.msra.mxu0 0.0
    %1085 = vmatprep.subr.mxu0 0.0
    %1086 = vmatpush2.msra.mxu0 0.0
    %1087 = vmatprep.subr.mxu0 0.0
    %1088 = vmatpush2.msra.mxu0 0.0
    %1089 = vmatprep.subr.mxu0 0.0
    %1090 = vmatpush2.msra.mxu0 0.0
    %1091 = vmatprep.subr.mxu0 0.0
    %1092 = vmatpush2.msra.mxu0 0.0
    %1093 = vmatprep.subr.mxu0 0.0
    %1094 = vmatpush2.msra.mxu0 0.0
    %1095 = vmatprep.subr.mxu0 0.0
    %1096 = vmatpush2.msra.mxu0 0.0
    %1097 = vmatprep.subr.mxu0 0.0
    %1098 = vmatpush2.msra.mxu0 0.0
    %1099 = vmatprep.mubr.f32.mxu0 0.0
    %1100 = vmatmul.mubr.f32.gmra.mxu0 %v1026
    %v1101 = vpop.f32.mrf.mxu0
    %v1102 = vadd.f32 %v1023, %v1101
    %v1103 = vpop.f32.mrf.mxu0
    %1104 = vmatprep.mubr.f32.mxu0 0.0
    %1105 = vmatmul.mubr.f32.gmra.mxu0 %v1029
    %v1106 = vpop.f32.mrf.mxu0
    %v1107 = vadd.f32 %v1023, %v1106
    %v1108 = vpop.f32.mrf.mxu0
    %1109 = vdwg.mxu0
    %v1110 = vsub.f32 0.0, %v1102
    %v1111 = vsub.f32 0.0, %v1107
    %v1112 = vmul.f32 %v1110, 1.442695
    %v1113 = vpow.pop %v1112
    %v1114 = vmul.f32 %v1111, 1.442695
    %v1115 = vpow.pop %v1114
    %v1116 = vadd.f32 %v1113, 1.0
    %v1117 = vadd.f32 %v1115, 1.0
    %v1118 = vrcp.pop %v1116
    %v1119 = vmul.f32 1.0, %v1118
    %v1120 = vrcp.pop %v1117
    %v1121 = vmul.f32 1.0, %v1120
    %v1122 = vmul.f32 %v802, %v1119
    %v1123 = vmul.f32 %v807, %v1121
    %v1126 = vcombine.high %v1122, %v1122
    %v1128 = vunpack.c.l.s4 1983009808
    %v1129 = vunpack.c.0.s8 %v1128
    %v1130 = vlaneseq
    %v1131 = vshrl.u32 %v1130, 7
    %v1132 = vsub.s32 %v1129, %v1131
    %v1133 = vrot.slane %v1122, %v1132
    %v1135 = vunpack.c.l.s4 1983009808
    %v1136 = vunpack.c.0.s8 %v1135
    %v1137 = vlaneseq
    %v1138 = vshrl.u32 %v1137, 7
    %v1139 = vsub.s32 %v1136, %v1138
    %v1140 = vrot.slane %v1126, %v1139
    %v1141 = vcombine.high %v1133, %v1133
    %v1142 = vcombine.high %v1140, %v1140
    %v1143 = vcombine.high %v1123, %v1123
    %v1145 = vunpack.c.l.s4 1983009808
    %v1146 = vunpack.c.0.s8 %v1145
    %v1147 = vlaneseq
    %v1148 = vshrl.u32 %v1147, 7
    %v1149 = vsub.s32 %v1146, %v1148
    %v1150 = vrot.slane %v1123, %v1149
    %v1152 = vunpack.c.l.s4 1983009808
    %v1153 = vunpack.c.0.s8 %v1152
    %v1154 = vlaneseq
    %v1155 = vshrl.u32 %v1154, 7
    %v1156 = vsub.s32 %v1153, %v1155
    %v1157 = vrot.slane %v1143, %v1156
    %v1158 = vcombine.high %v1150, %v1150
    %v1159 = vcombine.high %v1157, %v1157
    %v1168 = vcombine.low %v1133, %v1141
    %v1170 = vunpack.c.l.s4 1934713408
    %v1171 = vunpack.c.0.s8 %v1170
    %v1172 = vlaneseq
    %v1173 = vshrl.u32 %v1172, 7
    %v1174 = vsub.s32 %v1171, %v1173
    %v1175 = vrot.slane %v1168, %v1174
    %v1176 = vcombine.high %v1175, 0.0
    %v1177 = vcombine.low %v1140, %v1142
    %v1179 = vunpack.c.l.s4 1934713408
    %v1180 = vunpack.c.0.s8 %v1179
    %v1181 = vlaneseq
    %v1182 = vshrl.u32 %v1181, 7
    %v1183 = vsub.s32 %v1180, %v1182
    %v1184 = vrot.slane %v1177, %v1183
    %v1185 = vcombine.high %v1184, 0.0
    %v1186 = vcombine.low %v1150, %v1158
    %v1188 = vunpack.c.l.s4 1934713408
    %v1189 = vunpack.c.0.s8 %v1188
    %v1190 = vlaneseq
    %v1191 = vshrl.u32 %v1190, 7
    %v1192 = vsub.s32 %v1189, %v1191
    %v1193 = vrot.slane %v1186, %v1192
    %v1194 = vcombine.high %v1193, 0.0
    %v1195 = vcombine.low %v1157, %v1159
    %v1197 = vunpack.c.l.s4 1934713408
    %v1198 = vunpack.c.0.s8 %v1197
    %v1199 = vlaneseq
    %v1200 = vshrl.u32 %v1199, 7
    %v1201 = vsub.s32 %v1198, %v1200
    %v1202 = vrot.slane %v1195, %v1201
    %v1203 = vcombine.high %v1202, 0.0
    %v1212 = vcombine.low %v1175, %v1184
    %v1213 = vcombine.low %v1193, %v1202
    %v1215 = vunpack.c.l.s4 1983009808
    %v1216 = vunpack.c.0.s8 %v1215
    %v1217 = vlaneseq
    %v1218 = vshrl.u32 %v1217, 7
    %v1219 = vsub.s32 %v1216, %v1218
    %v1220 = vrot.slane %v1212, %v1219
    %v1222 = vunpack.c.l.s4 1983009808
    %v1223 = vunpack.c.0.s8 %v1222
    %v1224 = vlaneseq
    %v1225 = vshrl.u32 %v1224, 7
    %v1226 = vsub.s32 %v1223, %v1225
    %v1227 = vrot.slane %v1213, %v1226
    %v1228 = vcombine.low %v1220, %v1227
    %v1229 = vcombine.low %v1176, %v1185
    %v1230 = vcombine.low %v1194, %v1203
    %v1232 = vunpack.c.l.s4 1983009808
    %v1233 = vunpack.c.0.s8 %v1232
    %v1234 = vlaneseq
    %v1235 = vshrl.u32 %v1234, 7
    %v1236 = vsub.s32 %v1233, %v1235
    %v1237 = vrot.slane %v1229, %v1236
    %v1239 = vunpack.c.l.s4 1983009808
    %v1240 = vunpack.c.0.s8 %v1239
    %v1241 = vlaneseq
    %v1242 = vshrl.u32 %v1241, 7
    %v1243 = vsub.s32 %v1240, %v1242
    %v1244 = vrot.slane %v1230, %v1243
    %v1245 = vcombine.low %v1237, %v1244
    %1248 = vst.msk [vmem:[#allocation5] sm:$0xff] %vm664, %v1228
    %1249 = vst.msk [vmem:[#allocation5 + $0x8] sm:$0xff] %vm664, %v1245
    // Predicated region
    $region76: #{tpu_custom_call.1} parent=1 // pred_check
      _
    $region77: #{tpu_custom_call.1} parent=1 // pred_check_branch
      %1251 = sbr.rel (0) target = $region79
    $region78: #{tpu_custom_call.1} parent=1 // pred_region
      %s1253 = ssub.s32 256, 256
      %1254 = vsyncadd [#allocation6], %s1253
      %s1255 = sshll.u32 [#allocation5], 4
      %s1256 = int_to_ptr.vmem [resolvable:$true] %s1255
      %1261 = dma.vmem_to_hbm [thread:$0]  %s1256, 256, %s15, [#allocation6], 128, 128, 8
    $region79: #{tpu_custom_call.1} parent=1 // pred_fallthru
      _
    // Predicated region
    $region80: #{tpu_custom_call.1} parent=1 // pred_check
      _
    $region81: #{tpu_custom_call.1} parent=1 // pred_check_branch
      %1263 = sbr.rel (0) target = $region83
    $region82: #{tpu_custom_call.1} parent=1 // pred_region
      %1264 = dma.done [#allocation6], 256
    $region83: #{tpu_custom_call.1} parent=1 // pred_fallthru
      _
    %1265 = vsyncpa [#allocation6], 1

</llo_original>
